<compile_context>
chip_gen: v7x
topology: tpu7x:2x2x1
jax: 0.10.0
libtpu: 0.0.40
codegen_flags: <defaults>
</compile_context>

<pallas_src>
import jax
import jax.numpy as jnp
from jax import lax
from jax.experimental import pallas as pl
from jax.experimental.pallas import tpu as pltpu

# ---------------- config (synthetic instantiation) ----------------
VOCAB = 64
PAD_IDX = 0
D_IN = 32          # config.input_dim  (embedding dim)
H = 32             # config.d_model    (LSTM hidden size)
NUM_OUT = 8        # config.num_output
BATCH = 2
SEQ = 8


# ---------------- Pallas kernel ----------------
def lstm_seq_kernel(tok_ref, emb_ref, wih_ref, whh_ref, b_ref, wout_ref, bout_ref,
                    out_ref, x_buf, gates_buf):
    """Single-invocation fused embedding + LSTM + output head.

    tok_ref  : (BATCH*SEQ,) int32 in SMEM (scalar prefetch), row-major (b, t)
    emb_ref  : (VOCAB, 1, D_IN) f32    embedding table (resident VMEM)
    wih_ref  : (D_IN, 4H)       bf16   W_ih^T
    whh_ref  : (H, 4H)          bf16   W_hh^T
    b_ref    : (1, 4H)          f32    b_ih + b_hh
    wout_ref : (H, NUM_OUT)     bf16   W_out^T
    bout_ref : (1, NUM_OUT)     f32    b_out
    out_ref  : (BATCH*SEQ, NUM_OUT) f32 logits, batch-major (free reshape outside)
    x_buf    : (SEQ*BATCH, D_IN) f32 VMEM scratch  (time-major gathered embeddings)
    gates_buf: (SEQ*BATCH, 4H)   f32 VMEM scratch  (time-major x@W_ih^T + b)
    """
    # ---- Prologue 1: embedding gather (dynamic leading-dim loads, static stores) ----
    for t in range(SEQ):
        for b in range(BATCH):
            tok = tok_ref[b * SEQ + t]                       # scalar from SMEM
            x_buf[pl.ds(t * BATCH + b, 1), :] = emb_ref[tok]  # (1, D_IN)

    # ---- Prologue 2: input-to-hidden for ALL timesteps in one bf16 MXU pass ----
    gates_buf[...] = (
        jnp.dot(x_buf[...].astype(jnp.bfloat16), wih_ref[...],
                preferred_element_type=jnp.float32)
        + b_ref[...])                                        # (S*B, 4H) f32

    whh = whh_ref[...]                                       # bf16 (H, 4H), resident

    h = jnp.zeros((BATCH, H), jnp.float32)                   # init_hidden: zeros
    c = jnp.zeros((BATCH, H), jnp.float32)
    hs = []

    # ---- Recurrence, fully unrolled (SEQ static); only h@W_hh on the serial path ----
    for t in range(SEQ):
        gx = gates_buf[t * BATCH:(t + 1) * BATCH, :]         # static 2-sublane vld
        gates = gx + jnp.dot(h.astype(jnp.bfloat16), whh,
                             preferred_element_type=jnp.float32)   # (B, 4H) f32

        # Two full-vreg transcendentals, lane-sliced. PyTorch gate order: i, f, g, o.
        sig = jax.nn.sigmoid(gates)
        tnh = jnp.tanh(gates)
        i = sig[:, 0 * H:1 * H]
        f = sig[:, 1 * H:2 * H]
        g = tnh[:, 2 * H:3 * H]
        o = sig[:, 3 * H:4 * H]

        c = f * c + i * g
        h = o * jnp.tanh(c)
        hs.append(h)                                         # stays in vregs

    # ---- Epilogue: batch-major assembly + one bf16 matmul for the output head ----
    rows = []
    for b in range(BATCH):
        for t in range(SEQ):
            rows.append(hs[t][b:b + 1, :])                   # (1, H) static slice
    h_bm = jnp.concatenate(rows, axis=0)                     # (B*S, H) batch-major

    out_ref[...] = (jnp.dot(h_bm.astype(jnp.bfloat16), wout_ref[...],
                            preferred_element_type=jnp.float32)
                    + bout_ref[...])


def rnn_seq_label_forward(tokens, params):
    """tokens: (BATCH, SEQ) int32 -> logits (BATCH, SEQ, NUM_OUT) float32."""
    emb3 = params["emb"].astype(jnp.float32).reshape(VOCAB, 1, D_IN)
    wih_t = params["w_ih"].T.astype(jnp.bfloat16)            # (D_IN, 4H)
    whh_t = params["w_hh"].T.astype(jnp.bfloat16)            # (H, 4H)
    b = (params["b_ih"] + params["b_hh"]).reshape(1, 4 * H).astype(jnp.float32)
    wout_t = params["w_out"].T.astype(jnp.bfloat16)          # (H, NUM_OUT)
    bout = params["b_out"].reshape(1, NUM_OUT).astype(jnp.float32)

    logits_bm = pl.pallas_call(
        lstm_seq_kernel,
        out_shape=jax.ShapeDtypeStruct((BATCH * SEQ, NUM_OUT), jnp.float32),
        grid_spec=pltpu.PrefetchScalarGridSpec(
            num_scalar_prefetch=1,
            grid=(1,),
            in_specs=[
                pl.BlockSpec((VOCAB, 1, D_IN), lambda i, tok: (0, 0, 0)),
                pl.BlockSpec((D_IN, 4 * H), lambda i, tok: (0, 0)),
                pl.BlockSpec((H, 4 * H), lambda i, tok: (0, 0)),
                pl.BlockSpec((1, 4 * H), lambda i, tok: (0, 0)),
                pl.BlockSpec((H, NUM_OUT), lambda i, tok: (0, 0)),
                pl.BlockSpec((1, NUM_OUT), lambda i, tok: (0, 0)),
            ],
            out_specs=pl.BlockSpec((BATCH * SEQ, NUM_OUT), lambda i, tok: (0, 0)),
            scratch_shapes=[
                pltpu.VMEM((SEQ * BATCH, D_IN), jnp.float32),
                pltpu.VMEM((SEQ * BATCH, 4 * H), jnp.float32),
            ],
        ),
        compiler_params=pltpu.CompilerParams(
            dimension_semantics=("arbitrary",),               # serial recurrence
        ),
    )(tokens.reshape(-1).astype(jnp.int32),
      emb3, wih_t, whh_t, b, wout_t, bout)

    # Batch-major flat -> (B, S, NUM_OUT): pure metadata reshape, no transpose.
    return logits_bm.reshape(BATCH, SEQ, NUM_OUT)


# ---------------- pure-JAX reference (for verification) ----------------
def reference_forward(tokens, params):
    x = params["emb"][tokens]                                 # (B, S, D_IN)
    x_tm = jnp.swapaxes(x, 0, 1)                              # (S, B, D_IN)

    def step(carry, x_t):
        h, c = carry
        gates = (x_t @ params["w_ih"].T + params["b_ih"]
                 + h @ params["w_hh"].T + params["b_hh"])
        i, f, g, o = jnp.split(gates, 4, axis=-1)
        c = jax.nn.sigmoid(f) * c + jax.nn.sigmoid(i) * jnp.tanh(g)
        h = jax.nn.sigmoid(o) * jnp.tanh(c)
        return (h, c), h

    h0 = jnp.zeros((BATCH, H), jnp.float32)
    c0 = jnp.zeros((BATCH, H), jnp.float32)
    _, hs = lax.scan(step, (h0, c0), x_tm)                    # (S, B, H)
    out = jnp.swapaxes(hs, 0, 1)                              # (B, S, H)
    return out @ params["w_out"].T + params["b_out"]          # (B, S, NUM_OUT)


# ---------------- deterministic parameter init ----------------
def make_params(key):
    ks = jax.random.split(key, 8)
    scale = 0.1
    emb = scale * jax.random.normal(ks[0], (VOCAB, D_IN), jnp.float32)
    emb = emb.at[PAD_IDX].set(0.0)                            # padding_idx row zeroed
    return {
        "emb": emb,
        "w_ih": scale * jax.random.normal(ks[1], (4 * H, D_IN), jnp.float32),
        "w_hh": scale * jax.random.normal(ks[2], (4 * H, H), jnp.float32),
        "b_ih": scale * jax.random.normal(ks[3], (4 * H,), jnp.float32),
        "b_hh": scale * jax.random.normal(ks[4], (4 * H,), jnp.float32),
        "w_out": scale * jax.random.normal(ks[5], (NUM_OUT, H), jnp.float32),
        "b_out": scale * jax.random.normal(ks[6], (NUM_OUT,), jnp.float32),
    }


if __name__ == "__main__":
    key = jax.random.PRNGKey(0)
    pkey, tkey = jax.random.split(key)
    params = make_params(pkey)
    tokens = jax.random.randint(tkey, (BATCH, SEQ), 0, VOCAB, dtype=jnp.int32)

    fwd = jax.jit(rnn_seq_label_forward)
    logits = fwd(tokens, params)
    jax.block_until_ready(logits)

    ref = reference_forward(tokens, params)
    assert logits.shape == (BATCH, SEQ, NUM_OUT)
    # bf16 MXU operands with f32 accumulation -> relaxed tolerance vs f32 reference.
    assert jnp.allclose(logits, ref, atol=1e-2, rtol=1e-2), "mismatch vs reference"

    print("KERNEL_OK")
</pallas_src>

<mosaic_0001>
module attributes {stable_mosaic.version = 11 : i64} {
  func.func @lstm_seq_kernel(%arg0: i32, %arg1: memref<16xi32, #tpu.memory_space<smem>>, %arg2: memref<64x1x32xf32, #tpu.memory_space<vmem>>, %arg3: memref<32x128xbf16, #tpu.memory_space<vmem>>, %arg4: memref<32x128xbf16, #tpu.memory_space<vmem>>, %arg5: memref<1x128xf32, #tpu.memory_space<vmem>>, %arg6: memref<32x8xbf16, #tpu.memory_space<vmem>>, %arg7: memref<1x8xf32, #tpu.memory_space<vmem>>, %arg8: memref<16x8xf32, #tpu.memory_space<vmem>>, %arg9: memref<16x32xf32, #tpu.memory_space<vmem>>, %arg10: memref<16x128xf32, #tpu.memory_space<vmem>>) attributes {dimension_semantics = [#tpu.dimension_semantics<arbitrary>], iteration_bounds = array<i64: 1>, scalar_prefetch = 1 : i64, scratch_operands = 2 : i64, tpu.core_type = #tpu.core_type<tc>, window_params = [{pipeline_mode = #tpu.pipeline_mode<synchronous>, transform_indices = @transform_0, window_bounds = array<i64: 64, 1, 32>}, {pipeline_mode = #tpu.pipeline_mode<synchronous>, transform_indices = @transform_1, window_bounds = array<i64: 32, 128>}, {pipeline_mode = #tpu.pipeline_mode<synchronous>, transform_indices = @transform_2, window_bounds = array<i64: 32, 128>}, {pipeline_mode = #tpu.pipeline_mode<synchronous>, transform_indices = @transform_3, window_bounds = array<i64: 1, 128>}, {pipeline_mode = #tpu.pipeline_mode<synchronous>, transform_indices = @transform_4, window_bounds = array<i64: 32, 8>}, {pipeline_mode = #tpu.pipeline_mode<synchronous>, transform_indices = @transform_5, window_bounds = array<i64: 1, 8>}, {pipeline_mode = #tpu.pipeline_mode<synchronous>, transform_indices = @transform_6, window_bounds = array<i64: 16, 8>}]} {
    %c0 = arith.constant 0 : index
    %0 = memref.load %arg1[%c0] : memref<16xi32, #tpu.memory_space<smem>>
    %1 = arith.index_cast %0 : i32 to index
    %c0_0 = arith.constant 0 : index
    %c0_1 = arith.constant 0 : index
    %2 = vector.load %arg2[%1, %c0_0, %c0_1] : memref<64x1x32xf32, #tpu.memory_space<vmem>>, vector<1x1x32xf32>
    %3 = vector.shape_cast %2 : vector<1x1x32xf32> to vector<1x32xf32>
    %c0_2 = arith.constant 0 : index
    %c0_3 = arith.constant 0 : index
    %4 = vector.load %arg9[%c0_2, %c0_3] : memref<16x32xf32, #tpu.memory_space<vmem>>, vector<1x32xf32>
    tpu.vector_store %arg9[%c0_2, %c0_3], %3 {strides = array<i32>} : memref<16x32xf32, #tpu.memory_space<vmem>>, vector<1x32xf32>,
    %c8 = arith.constant 8 : index
    %5 = memref.load %arg1[%c8] : memref<16xi32, #tpu.memory_space<smem>>
    %6 = arith.index_cast %5 : i32 to index
    %c0_4 = arith.constant 0 : index
    %c0_5 = arith.constant 0 : index
    %7 = vector.load %arg2[%6, %c0_4, %c0_5] : memref<64x1x32xf32, #tpu.memory_space<vmem>>, vector<1x1x32xf32>
    %8 = vector.shape_cast %7 : vector<1x1x32xf32> to vector<1x32xf32>
    %c1 = arith.constant 1 : index
    %c0_6 = arith.constant 0 : index
    %9 = vector.load %arg9[%c1, %c0_6] : memref<16x32xf32, #tpu.memory_space<vmem>>, vector<1x32xf32>
    tpu.vector_store %arg9[%c1, %c0_6], %8 {strides = array<i32>} : memref<16x32xf32, #tpu.memory_space<vmem>>, vector<1x32xf32>,
    %c1_7 = arith.constant 1 : index
    %10 = memref.load %arg1[%c1_7] : memref<16xi32, #tpu.memory_space<smem>>
    %11 = arith.index_cast %10 : i32 to index
    %c0_8 = arith.constant 0 : index
    %c0_9 = arith.constant 0 : index
    %12 = vector.load %arg2[%11, %c0_8, %c0_9] : memref<64x1x32xf32, #tpu.memory_space<vmem>>, vector<1x1x32xf32>
    %13 = vector.shape_cast %12 : vector<1x1x32xf32> to vector<1x32xf32>
    %c2 = arith.constant 2 : index
    %c0_10 = arith.constant 0 : index
    %14 = vector.load %arg9[%c2, %c0_10] : memref<16x32xf32, #tpu.memory_space<vmem>>, vector<1x32xf32>
    tpu.vector_store %arg9[%c2, %c0_10], %13 {strides = array<i32>} : memref<16x32xf32, #tpu.memory_space<vmem>>, vector<1x32xf32>,
    %c9 = arith.constant 9 : index
    %15 = memref.load %arg1[%c9] : memref<16xi32, #tpu.memory_space<smem>>
    %16 = arith.index_cast %15 : i32 to index
    %c0_11 = arith.constant 0 : index
    %c0_12 = arith.constant 0 : index
    %17 = vector.load %arg2[%16, %c0_11, %c0_12] : memref<64x1x32xf32, #tpu.memory_space<vmem>>, vector<1x1x32xf32>
    %18 = vector.shape_cast %17 : vector<1x1x32xf32> to vector<1x32xf32>
    %c3 = arith.constant 3 : index
    %c0_13 = arith.constant 0 : index
    %19 = vector.load %arg9[%c3, %c0_13] : memref<16x32xf32, #tpu.memory_space<vmem>>, vector<1x32xf32>
    tpu.vector_store %arg9[%c3, %c0_13], %18 {strides = array<i32>} : memref<16x32xf32, #tpu.memory_space<vmem>>, vector<1x32xf32>,
    %c2_14 = arith.constant 2 : index
    %20 = memref.load %arg1[%c2_14] : memref<16xi32, #tpu.memory_space<smem>>
    %21 = arith.index_cast %20 : i32 to index
    %c0_15 = arith.constant 0 : index
    %c0_16 = arith.constant 0 : index
    %22 = vector.load %arg2[%21, %c0_15, %c0_16] : memref<64x1x32xf32, #tpu.memory_space<vmem>>, vector<1x1x32xf32>
    %23 = vector.shape_cast %22 : vector<1x1x32xf32> to vector<1x32xf32>
    %c4 = arith.constant 4 : index
    %c0_17 = arith.constant 0 : index
    %24 = vector.load %arg9[%c4, %c0_17] : memref<16x32xf32, #tpu.memory_space<vmem>>, vector<1x32xf32>
    tpu.vector_store %arg9[%c4, %c0_17], %23 {strides = array<i32>} : memref<16x32xf32, #tpu.memory_space<vmem>>, vector<1x32xf32>,
    %c10 = arith.constant 10 : index
    %25 = memref.load %arg1[%c10] : memref<16xi32, #tpu.memory_space<smem>>
    %26 = arith.index_cast %25 : i32 to index
    %c0_18 = arith.constant 0 : index
    %c0_19 = arith.constant 0 : index
    %27 = vector.load %arg2[%26, %c0_18, %c0_19] : memref<64x1x32xf32, #tpu.memory_space<vmem>>, vector<1x1x32xf32>
    %28 = vector.shape_cast %27 : vector<1x1x32xf32> to vector<1x32xf32>
    %c5 = arith.constant 5 : index
    %c0_20 = arith.constant 0 : index
    %29 = vector.load %arg9[%c5, %c0_20] : memref<16x32xf32, #tpu.memory_space<vmem>>, vector<1x32xf32>
    tpu.vector_store %arg9[%c5, %c0_20], %28 {strides = array<i32>} : memref<16x32xf32, #tpu.memory_space<vmem>>, vector<1x32xf32>,
    %c3_21 = arith.constant 3 : index
    %30 = memref.load %arg1[%c3_21] : memref<16xi32, #tpu.memory_space<smem>>
    %31 = arith.index_cast %30 : i32 to index
    %c0_22 = arith.constant 0 : index
    %c0_23 = arith.constant 0 : index
    %32 = vector.load %arg2[%31, %c0_22, %c0_23] : memref<64x1x32xf32, #tpu.memory_space<vmem>>, vector<1x1x32xf32>
    %33 = vector.shape_cast %32 : vector<1x1x32xf32> to vector<1x32xf32>
    %c6 = arith.constant 6 : index
    %c0_24 = arith.constant 0 : index
    %34 = vector.load %arg9[%c6, %c0_24] : memref<16x32xf32, #tpu.memory_space<vmem>>, vector<1x32xf32>
    tpu.vector_store %arg9[%c6, %c0_24], %33 {strides = array<i32>} : memref<16x32xf32, #tpu.memory_space<vmem>>, vector<1x32xf32>,
    %c11 = arith.constant 11 : index
    %35 = memref.load %arg1[%c11] : memref<16xi32, #tpu.memory_space<smem>>
    %36 = arith.index_cast %35 : i32 to index
    %c0_25 = arith.constant 0 : index
    %c0_26 = arith.constant 0 : index
    %37 = vector.load %arg2[%36, %c0_25, %c0_26] : memref<64x1x32xf32, #tpu.memory_space<vmem>>, vector<1x1x32xf32>
    %38 = vector.shape_cast %37 : vector<1x1x32xf32> to vector<1x32xf32>
    %c7 = arith.constant 7 : index
    %c0_27 = arith.constant 0 : index
    %39 = vector.load %arg9[%c7, %c0_27] : memref<16x32xf32, #tpu.memory_space<vmem>>, vector<1x32xf32>
    tpu.vector_store %arg9[%c7, %c0_27], %38 {strides = array<i32>} : memref<16x32xf32, #tpu.memory_space<vmem>>, vector<1x32xf32>,
    %c4_28 = arith.constant 4 : index
    %40 = memref.load %arg1[%c4_28] : memref<16xi32, #tpu.memory_space<smem>>
    %41 = arith.index_cast %40 : i32 to index
    %c0_29 = arith.constant 0 : index
    %c0_30 = arith.constant 0 : index
    %42 = vector.load %arg2[%41, %c0_29, %c0_30] : memref<64x1x32xf32, #tpu.memory_space<vmem>>, vector<1x1x32xf32>
    %43 = vector.shape_cast %42 : vector<1x1x32xf32> to vector<1x32xf32>
    %c8_31 = arith.constant 8 : index
    %c0_32 = arith.constant 0 : index
    %44 = vector.load %arg9[%c8_31, %c0_32] : memref<16x32xf32, #tpu.memory_space<vmem>>, vector<1x32xf32>
    tpu.vector_store %arg9[%c8_31, %c0_32], %43 {strides = array<i32>} : memref<16x32xf32, #tpu.memory_space<vmem>>, vector<1x32xf32>,
    %c12 = arith.constant 12 : index
    %45 = memref.load %arg1[%c12] : memref<16xi32, #tpu.memory_space<smem>>
    %46 = arith.index_cast %45 : i32 to index
    %c0_33 = arith.constant 0 : index
    %c0_34 = arith.constant 0 : index
    %47 = vector.load %arg2[%46, %c0_33, %c0_34] : memref<64x1x32xf32, #tpu.memory_space<vmem>>, vector<1x1x32xf32>
    %48 = vector.shape_cast %47 : vector<1x1x32xf32> to vector<1x32xf32>
    %c9_35 = arith.constant 9 : index
    %c0_36 = arith.constant 0 : index
    %49 = vector.load %arg9[%c9_35, %c0_36] : memref<16x32xf32, #tpu.memory_space<vmem>>, vector<1x32xf32>
    tpu.vector_store %arg9[%c9_35, %c0_36], %48 {strides = array<i32>} : memref<16x32xf32, #tpu.memory_space<vmem>>, vector<1x32xf32>,
    %c5_37 = arith.constant 5 : index
    %50 = memref.load %arg1[%c5_37] : memref<16xi32, #tpu.memory_space<smem>>
    %51 = arith.index_cast %50 : i32 to index
    %c0_38 = arith.constant 0 : index
    %c0_39 = arith.constant 0 : index
    %52 = vector.load %arg2[%51, %c0_38, %c0_39] : memref<64x1x32xf32, #tpu.memory_space<vmem>>, vector<1x1x32xf32>
    %53 = vector.shape_cast %52 : vector<1x1x32xf32> to vector<1x32xf32>
    %c10_40 = arith.constant 10 : index
    %c0_41 = arith.constant 0 : index
    %54 = vector.load %arg9[%c10_40, %c0_41] : memref<16x32xf32, #tpu.memory_space<vmem>>, vector<1x32xf32>
    tpu.vector_store %arg9[%c10_40, %c0_41], %53 {strides = array<i32>} : memref<16x32xf32, #tpu.memory_space<vmem>>, vector<1x32xf32>,
    %c13 = arith.constant 13 : index
    %55 = memref.load %arg1[%c13] : memref<16xi32, #tpu.memory_space<smem>>
    %56 = arith.index_cast %55 : i32 to index
    %c0_42 = arith.constant 0 : index
    %c0_43 = arith.constant 0 : index
    %57 = vector.load %arg2[%56, %c0_42, %c0_43] : memref<64x1x32xf32, #tpu.memory_space<vmem>>, vector<1x1x32xf32>
    %58 = vector.shape_cast %57 : vector<1x1x32xf32> to vector<1x32xf32>
    %c11_44 = arith.constant 11 : index
    %c0_45 = arith.constant 0 : index
    %59 = vector.load %arg9[%c11_44, %c0_45] : memref<16x32xf32, #tpu.memory_space<vmem>>, vector<1x32xf32>
    tpu.vector_store %arg9[%c11_44, %c0_45], %58 {strides = array<i32>} : memref<16x32xf32, #tpu.memory_space<vmem>>, vector<1x32xf32>,
    %c6_46 = arith.constant 6 : index
    %60 = memref.load %arg1[%c6_46] : memref<16xi32, #tpu.memory_space<smem>>
    %61 = arith.index_cast %60 : i32 to index
    %c0_47 = arith.constant 0 : index
    %c0_48 = arith.constant 0 : index
    %62 = vector.load %arg2[%61, %c0_47, %c0_48] : memref<64x1x32xf32, #tpu.memory_space<vmem>>, vector<1x1x32xf32>
    %63 = vector.shape_cast %62 : vector<1x1x32xf32> to vector<1x32xf32>
    %c12_49 = arith.constant 12 : index
    %c0_50 = arith.constant 0 : index
    %64 = vector.load %arg9[%c12_49, %c0_50] : memref<16x32xf32, #tpu.memory_space<vmem>>, vector<1x32xf32>
    tpu.vector_store %arg9[%c12_49, %c0_50], %63 {strides = array<i32>} : memref<16x32xf32, #tpu.memory_space<vmem>>, vector<1x32xf32>,
    %c14 = arith.constant 14 : index
    %65 = memref.load %arg1[%c14] : memref<16xi32, #tpu.memory_space<smem>>
    %66 = arith.index_cast %65 : i32 to index
    %c0_51 = arith.constant 0 : index
    %c0_52 = arith.constant 0 : index
    %67 = vector.load %arg2[%66, %c0_51, %c0_52] : memref<64x1x32xf32, #tpu.memory_space<vmem>>, vector<1x1x32xf32>
    %68 = vector.shape_cast %67 : vector<1x1x32xf32> to vector<1x32xf32>
    %c13_53 = arith.constant 13 : index
    %c0_54 = arith.constant 0 : index
    %69 = vector.load %arg9[%c13_53, %c0_54] : memref<16x32xf32, #tpu.memory_space<vmem>>, vector<1x32xf32>
    tpu.vector_store %arg9[%c13_53, %c0_54], %68 {strides = array<i32>} : memref<16x32xf32, #tpu.memory_space<vmem>>, vector<1x32xf32>,
    %c7_55 = arith.constant 7 : index
    %70 = memref.load %arg1[%c7_55] : memref<16xi32, #tpu.memory_space<smem>>
    %71 = arith.index_cast %70 : i32 to index
    %c0_56 = arith.constant 0 : index
    %c0_57 = arith.constant 0 : index
    %72 = vector.load %arg2[%71, %c0_56, %c0_57] : memref<64x1x32xf32, #tpu.memory_space<vmem>>, vector<1x1x32xf32>
    %73 = vector.shape_cast %72 : vector<1x1x32xf32> to vector<1x32xf32>
    %c14_58 = arith.constant 14 : index
    %c0_59 = arith.constant 0 : index
    %74 = vector.load %arg9[%c14_58, %c0_59] : memref<16x32xf32, #tpu.memory_space<vmem>>, vector<1x32xf32>
    tpu.vector_store %arg9[%c14_58, %c0_59], %73 {strides = array<i32>} : memref<16x32xf32, #tpu.memory_space<vmem>>, vector<1x32xf32>,
    %c15 = arith.constant 15 : index
    %75 = memref.load %arg1[%c15] : memref<16xi32, #tpu.memory_space<smem>>
    %76 = arith.index_cast %75 : i32 to index
    %c0_60 = arith.constant 0 : index
    %c0_61 = arith.constant 0 : index
    %77 = vector.load %arg2[%76, %c0_60, %c0_61] : memref<64x1x32xf32, #tpu.memory_space<vmem>>, vector<1x1x32xf32>
    %78 = vector.shape_cast %77 : vector<1x1x32xf32> to vector<1x32xf32>
    %c15_62 = arith.constant 15 : index
    %c0_63 = arith.constant 0 : index
    %79 = vector.load %arg9[%c15_62, %c0_63] : memref<16x32xf32, #tpu.memory_space<vmem>>, vector<1x32xf32>
    tpu.vector_store %arg9[%c15_62, %c0_63], %78 {strides = array<i32>} : memref<16x32xf32, #tpu.memory_space<vmem>>, vector<1x32xf32>,
    %c0_64 = arith.constant 0 : index
    %c0_65 = arith.constant 0 : index
    %80 = vector.load %arg9[%c0_64, %c0_65] : memref<16x32xf32, #tpu.memory_space<vmem>>, vector<16x32xf32>
    %81 = arith.truncf %80 : vector<16x32xf32> to vector<16x32xbf16>
    %c0_66 = arith.constant 0 : index
    %c0_67 = arith.constant 0 : index
    %82 = vector.load %arg3[%c0_66, %c0_67] : memref<32x128xbf16, #tpu.memory_space<vmem>>, vector<32x128xbf16>
    %cst = arith.constant dense<0.000000e+00> : vector<16x128xf32>
    %83 = tpu.matmul %81, %82, %cst {dimension_numbers = #tpu.dot_dimension_numbers<[1], [0], [0], [1], [0, 0, 1, 1], [], []>} : vector<16x32xbf16>, vector<32x128xbf16>, vector<16x128xf32> -> vector<16x128xf32>
    %c0_68 = arith.constant 0 : index
    %c0_69 = arith.constant 0 : index
    %84 = vector.load %arg5[%c0_68, %c0_69] : memref<1x128xf32, #tpu.memory_space<vmem>>, vector<1x128xf32>
    %85 = vector.broadcast %84 : vector<1x128xf32> to vector<16x128xf32>
    %86 = arith.addf %83, %85 : vector<16x128xf32>
    %c0_70 = arith.constant 0 : index
    %c0_71 = arith.constant 0 : index
    %87 = vector.load %arg10[%c0_70, %c0_71] : memref<16x128xf32, #tpu.memory_space<vmem>>, vector<16x128xf32>
    tpu.vector_store %arg10[%c0_70, %c0_71], %86 {strides = array<i32>} : memref<16x128xf32, #tpu.memory_space<vmem>>, vector<16x128xf32>,
    %c0_72 = arith.constant 0 : index
    %c0_73 = arith.constant 0 : index
    %88 = vector.load %arg4[%c0_72, %c0_73] : memref<32x128xbf16, #tpu.memory_space<vmem>>, vector<32x128xbf16>
    %cst_74 = arith.constant 0.000000e+00 : f32
    %89 = vector.broadcast %cst_74 : f32 to vector<2x32xf32>
    %cst_75 = arith.constant 0.000000e+00 : f32
    %90 = vector.broadcast %cst_75 : f32 to vector<2x32xf32>
    %c0_76 = arith.constant 0 : index
    %c0_77 = arith.constant 0 : index
    %91 = vector.load %arg10[%c0_76, %c0_77] : memref<16x128xf32, #tpu.memory_space<vmem>>, vector<2x128xf32>
    %92 = arith.truncf %89 : vector<2x32xf32> to vector<2x32xbf16>
    %cst_78 = arith.constant dense<0.000000e+00> : vector<2x128xf32>
    %93 = tpu.matmul %92, %88, %cst_78 {dimension_numbers = #tpu.dot_dimension_numbers<[1], [0], [0], [1], [0, 0, 1, 1], [], []>} : vector<2x32xbf16>, vector<32x128xbf16>, vector<2x128xf32> -> vector<2x128xf32>
    %94 = arith.addf %91, %93 : vector<2x128xf32>
    %95 = arith.negf %94 : vector<2x128xf32>
    %96 = math.exp %95 : vector<2x128xf32>
    %cst_79 = arith.constant 1.000000e+00 : f32
    %97 = vector.broadcast %cst_79 : f32 to vector<2x128xf32>
    %98 = arith.addf %97, %96 : vector<2x128xf32>
    %99 = arith.divf %97, %98 : vector<2x128xf32>
    %100 = math.tanh %94 : vector<2x128xf32>
    %101 = vector.extract_strided_slice %99 {offsets = [0, 0], sizes = [2, 32], strides = [1, 1]} : vector<2x128xf32> to vector<2x32xf32>
    %102 = vector.extract_strided_slice %99 {offsets = [0, 32], sizes = [2, 32], strides = [1, 1]} : vector<2x128xf32> to vector<2x32xf32>
    %103 = vector.extract_strided_slice %100 {offsets = [0, 64], sizes = [2, 32], strides = [1, 1]} : vector<2x128xf32> to vector<2x32xf32>
    %104 = vector.extract_strided_slice %99 {offsets = [0, 96], sizes = [2, 32], strides = [1, 1]} : vector<2x128xf32> to vector<2x32xf32>
    %105 = arith.mulf %102, %90 : vector<2x32xf32>
    %106 = arith.mulf %101, %103 : vector<2x32xf32>
    %107 = arith.addf %105, %106 : vector<2x32xf32>
    %108 = math.tanh %107 : vector<2x32xf32>
    %109 = arith.mulf %104, %108 : vector<2x32xf32>
    %c2_80 = arith.constant 2 : index
    %c0_81 = arith.constant 0 : index
    %110 = vector.load %arg10[%c2_80, %c0_81] : memref<16x128xf32, #tpu.memory_space<vmem>>, vector<2x128xf32>
    %111 = arith.truncf %109 : vector<2x32xf32> to vector<2x32xbf16>
    %cst_82 = arith.constant dense<0.000000e+00> : vector<2x128xf32>
    %112 = tpu.matmul %111, %88, %cst_82 {dimension_numbers = #tpu.dot_dimension_numbers<[1], [0], [0], [1], [0, 0, 1, 1], [], []>} : vector<2x32xbf16>, vector<32x128xbf16>, vector<2x128xf32> -> vector<2x128xf32>
    %113 = arith.addf %110, %112 : vector<2x128xf32>
    %114 = arith.negf %113 : vector<2x128xf32>
    %115 = math.exp %114 : vector<2x128xf32>
    %cst_83 = arith.constant 1.000000e+00 : f32
    %116 = vector.broadcast %cst_83 : f32 to vector<2x128xf32>
    %117 = arith.addf %116, %115 : vector<2x128xf32>
    %118 = arith.divf %116, %117 : vector<2x128xf32>
    %119 = math.tanh %113 : vector<2x128xf32>
    %120 = vector.extract_strided_slice %118 {offsets = [0, 0], sizes = [2, 32], strides = [1, 1]} : vector<2x128xf32> to vector<2x32xf32>
    %121 = vector.extract_strided_slice %118 {offsets = [0, 32], sizes = [2, 32], strides = [1, 1]} : vector<2x128xf32> to vector<2x32xf32>
    %122 = vector.extract_strided_slice %119 {offsets = [0, 64], sizes = [2, 32], strides = [1, 1]} : vector<2x128xf32> to vector<2x32xf32>
    %123 = vector.extract_strided_slice %118 {offsets = [0, 96], sizes = [2, 32], strides = [1, 1]} : vector<2x128xf32> to vector<2x32xf32>
    %124 = arith.mulf %121, %107 : vector<2x32xf32>
    %125 = arith.mulf %120, %122 : vector<2x32xf32>
    %126 = arith.addf %124, %125 : vector<2x32xf32>
    %127 = math.tanh %126 : vector<2x32xf32>
    %128 = arith.mulf %123, %127 : vector<2x32xf32>
    %c4_84 = arith.constant 4 : index
    %c0_85 = arith.constant 0 : index
    %129 = vector.load %arg10[%c4_84, %c0_85] : memref<16x128xf32, #tpu.memory_space<vmem>>, vector<2x128xf32>
    %130 = arith.truncf %128 : vector<2x32xf32> to vector<2x32xbf16>
    %cst_86 = arith.constant dense<0.000000e+00> : vector<2x128xf32>
    %131 = tpu.matmul %130, %88, %cst_86 {dimension_numbers = #tpu.dot_dimension_numbers<[1], [0], [0], [1], [0, 0, 1, 1], [], []>} : vector<2x32xbf16>, vector<32x128xbf16>, vector<2x128xf32> -> vector<2x128xf32>
    %132 = arith.addf %129, %131 : vector<2x128xf32>
    %133 = arith.negf %132 : vector<2x128xf32>
    %134 = math.exp %133 : vector<2x128xf32>
    %cst_87 = arith.constant 1.000000e+00 : f32
    %135 = vector.broadcast %cst_87 : f32 to vector<2x128xf32>
    %136 = arith.addf %135, %134 : vector<2x128xf32>
    %137 = arith.divf %135, %136 : vector<2x128xf32>
    %138 = math.tanh %132 : vector<2x128xf32>
    %139 = vector.extract_strided_slice %137 {offsets = [0, 0], sizes = [2, 32], strides = [1, 1]} : vector<2x128xf32> to vector<2x32xf32>
    %140 = vector.extract_strided_slice %137 {offsets = [0, 32], sizes = [2, 32], strides = [1, 1]} : vector<2x128xf32> to vector<2x32xf32>
    %141 = vector.extract_strided_slice %138 {offsets = [0, 64], sizes = [2, 32], strides = [1, 1]} : vector<2x128xf32> to vector<2x32xf32>
    %142 = vector.extract_strided_slice %137 {offsets = [0, 96], sizes = [2, 32], strides = [1, 1]} : vector<2x128xf32> to vector<2x32xf32>
    %143 = arith.mulf %140, %126 : vector<2x32xf32>
    %144 = arith.mulf %139, %141 : vector<2x32xf32>
    %145 = arith.addf %143, %144 : vector<2x32xf32>
    %146 = math.tanh %145 : vector<2x32xf32>
    %147 = arith.mulf %142, %146 : vector<2x32xf32>
    %c6_88 = arith.constant 6 : index
    %c0_89 = arith.constant 0 : index
    %148 = vector.load %arg10[%c6_88, %c0_89] : memref<16x128xf32, #tpu.memory_space<vmem>>, vector<2x128xf32>
    %149 = arith.truncf %147 : vector<2x32xf32> to vector<2x32xbf16>
    %cst_90 = arith.constant dense<0.000000e+00> : vector<2x128xf32>
    %150 = tpu.matmul %149, %88, %cst_90 {dimension_numbers = #tpu.dot_dimension_numbers<[1], [0], [0], [1], [0, 0, 1, 1], [], []>} : vector<2x32xbf16>, vector<32x128xbf16>, vector<2x128xf32> -> vector<2x128xf32>
    %151 = arith.addf %148, %150 : vector<2x128xf32>
    %152 = arith.negf %151 : vector<2x128xf32>
    %153 = math.exp %152 : vector<2x128xf32>
    %cst_91 = arith.constant 1.000000e+00 : f32
    %154 = vector.broadcast %cst_91 : f32 to vector<2x128xf32>
    %155 = arith.addf %154, %153 : vector<2x128xf32>
    %156 = arith.divf %154, %155 : vector<2x128xf32>
    %157 = math.tanh %151 : vector<2x128xf32>
    %158 = vector.extract_strided_slice %156 {offsets = [0, 0], sizes = [2, 32], strides = [1, 1]} : vector<2x128xf32> to vector<2x32xf32>
    %159 = vector.extract_strided_slice %156 {offsets = [0, 32], sizes = [2, 32], strides = [1, 1]} : vector<2x128xf32> to vector<2x32xf32>
    %160 = vector.extract_strided_slice %157 {offsets = [0, 64], sizes = [2, 32], strides = [1, 1]} : vector<2x128xf32> to vector<2x32xf32>
    %161 = vector.extract_strided_slice %156 {offsets = [0, 96], sizes = [2, 32], strides = [1, 1]} : vector<2x128xf32> to vector<2x32xf32>
    %162 = arith.mulf %159, %145 : vector<2x32xf32>
    %163 = arith.mulf %158, %160 : vector<2x32xf32>
    %164 = arith.addf %162, %163 : vector<2x32xf32>
    %165 = math.tanh %164 : vector<2x32xf32>
    %166 = arith.mulf %161, %165 : vector<2x32xf32>
    %c8_92 = arith.constant 8 : index
    %c0_93 = arith.constant 0 : index
    %167 = vector.load %arg10[%c8_92, %c0_93] : memref<16x128xf32, #tpu.memory_space<vmem>>, vector<2x128xf32>
    %168 = arith.truncf %166 : vector<2x32xf32> to vector<2x32xbf16>
    %cst_94 = arith.constant dense<0.000000e+00> : vector<2x128xf32>
    %169 = tpu.matmul %168, %88, %cst_94 {dimension_numbers = #tpu.dot_dimension_numbers<[1], [0], [0], [1], [0, 0, 1, 1], [], []>} : vector<2x32xbf16>, vector<32x128xbf16>, vector<2x128xf32> -> vector<2x128xf32>
    %170 = arith.addf %167, %169 : vector<2x128xf32>
    %171 = arith.negf %170 : vector<2x128xf32>
    %172 = math.exp %171 : vector<2x128xf32>
    %cst_95 = arith.constant 1.000000e+00 : f32
    %173 = vector.broadcast %cst_95 : f32 to vector<2x128xf32>
    %174 = arith.addf %173, %172 : vector<2x128xf32>
    %175 = arith.divf %173, %174 : vector<2x128xf32>
    %176 = math.tanh %170 : vector<2x128xf32>
    %177 = vector.extract_strided_slice %175 {offsets = [0, 0], sizes = [2, 32], strides = [1, 1]} : vector<2x128xf32> to vector<2x32xf32>
    %178 = vector.extract_strided_slice %175 {offsets = [0, 32], sizes = [2, 32], strides = [1, 1]} : vector<2x128xf32> to vector<2x32xf32>
    %179 = vector.extract_strided_slice %176 {offsets = [0, 64], sizes = [2, 32], strides = [1, 1]} : vector<2x128xf32> to vector<2x32xf32>
    %180 = vector.extract_strided_slice %175 {offsets = [0, 96], sizes = [2, 32], strides = [1, 1]} : vector<2x128xf32> to vector<2x32xf32>
    %181 = arith.mulf %178, %164 : vector<2x32xf32>
    %182 = arith.mulf %177, %179 : vector<2x32xf32>
    %183 = arith.addf %181, %182 : vector<2x32xf32>
    %184 = math.tanh %183 : vector<2x32xf32>
    %185 = arith.mulf %180, %184 : vector<2x32xf32>
    %c10_96 = arith.constant 10 : index
    %c0_97 = arith.constant 0 : index
    %186 = vector.load %arg10[%c10_96, %c0_97] : memref<16x128xf32, #tpu.memory_space<vmem>>, vector<2x128xf32>
    %187 = arith.truncf %185 : vector<2x32xf32> to vector<2x32xbf16>
    %cst_98 = arith.constant dense<0.000000e+00> : vector<2x128xf32>
    %188 = tpu.matmul %187, %88, %cst_98 {dimension_numbers = #tpu.dot_dimension_numbers<[1], [0], [0], [1], [0, 0, 1, 1], [], []>} : vector<2x32xbf16>, vector<32x128xbf16>, vector<2x128xf32> -> vector<2x128xf32>
    %189 = arith.addf %186, %188 : vector<2x128xf32>
    %190 = arith.negf %189 : vector<2x128xf32>
    %191 = math.exp %190 : vector<2x128xf32>
    %cst_99 = arith.constant 1.000000e+00 : f32
    %192 = vector.broadcast %cst_99 : f32 to vector<2x128xf32>
    %193 = arith.addf %192, %191 : vector<2x128xf32>
    %194 = arith.divf %192, %193 : vector<2x128xf32>
    %195 = math.tanh %189 : vector<2x128xf32>
    %196 = vector.extract_strided_slice %194 {offsets = [0, 0], sizes = [2, 32], strides = [1, 1]} : vector<2x128xf32> to vector<2x32xf32>
    %197 = vector.extract_strided_slice %194 {offsets = [0, 32], sizes = [2, 32], strides = [1, 1]} : vector<2x128xf32> to vector<2x32xf32>
    %198 = vector.extract_strided_slice %195 {offsets = [0, 64], sizes = [2, 32], strides = [1, 1]} : vector<2x128xf32> to vector<2x32xf32>
    %199 = vector.extract_strided_slice %194 {offsets = [0, 96], sizes = [2, 32], strides = [1, 1]} : vector<2x128xf32> to vector<2x32xf32>
    %200 = arith.mulf %197, %183 : vector<2x32xf32>
    %201 = arith.mulf %196, %198 : vector<2x32xf32>
    %202 = arith.addf %200, %201 : vector<2x32xf32>
    %203 = math.tanh %202 : vector<2x32xf32>
    %204 = arith.mulf %199, %203 : vector<2x32xf32>
    %c12_100 = arith.constant 12 : index
    %c0_101 = arith.constant 0 : index
    %205 = vector.load %arg10[%c12_100, %c0_101] : memref<16x128xf32, #tpu.memory_space<vmem>>, vector<2x128xf32>
    %206 = arith.truncf %204 : vector<2x32xf32> to vector<2x32xbf16>
    %cst_102 = arith.constant dense<0.000000e+00> : vector<2x128xf32>
    %207 = tpu.matmul %206, %88, %cst_102 {dimension_numbers = #tpu.dot_dimension_numbers<[1], [0], [0], [1], [0, 0, 1, 1], [], []>} : vector<2x32xbf16>, vector<32x128xbf16>, vector<2x128xf32> -> vector<2x128xf32>
    %208 = arith.addf %205, %207 : vector<2x128xf32>
    %209 = arith.negf %208 : vector<2x128xf32>
    %210 = math.exp %209 : vector<2x128xf32>
    %cst_103 = arith.constant 1.000000e+00 : f32
    %211 = vector.broadcast %cst_103 : f32 to vector<2x128xf32>
    %212 = arith.addf %211, %210 : vector<2x128xf32>
    %213 = arith.divf %211, %212 : vector<2x128xf32>
    %214 = math.tanh %208 : vector<2x128xf32>
    %215 = vector.extract_strided_slice %213 {offsets = [0, 0], sizes = [2, 32], strides = [1, 1]} : vector<2x128xf32> to vector<2x32xf32>
    %216 = vector.extract_strided_slice %213 {offsets = [0, 32], sizes = [2, 32], strides = [1, 1]} : vector<2x128xf32> to vector<2x32xf32>
    %217 = vector.extract_strided_slice %214 {offsets = [0, 64], sizes = [2, 32], strides = [1, 1]} : vector<2x128xf32> to vector<2x32xf32>
    %218 = vector.extract_strided_slice %213 {offsets = [0, 96], sizes = [2, 32], strides = [1, 1]} : vector<2x128xf32> to vector<2x32xf32>
    %219 = arith.mulf %216, %202 : vector<2x32xf32>
    %220 = arith.mulf %215, %217 : vector<2x32xf32>
    %221 = arith.addf %219, %220 : vector<2x32xf32>
    %222 = math.tanh %221 : vector<2x32xf32>
    %223 = arith.mulf %218, %222 : vector<2x32xf32>
    %c14_104 = arith.constant 14 : index
    %c0_105 = arith.constant 0 : index
    %224 = vector.load %arg10[%c14_104, %c0_105] : memref<16x128xf32, #tpu.memory_space<vmem>>, vector<2x128xf32>
    %225 = arith.truncf %223 : vector<2x32xf32> to vector<2x32xbf16>
    %cst_106 = arith.constant dense<0.000000e+00> : vector<2x128xf32>
    %226 = tpu.matmul %225, %88, %cst_106 {dimension_numbers = #tpu.dot_dimension_numbers<[1], [0], [0], [1], [0, 0, 1, 1], [], []>} : vector<2x32xbf16>, vector<32x128xbf16>, vector<2x128xf32> -> vector<2x128xf32>
    %227 = arith.addf %224, %226 : vector<2x128xf32>
    %228 = arith.negf %227 : vector<2x128xf32>
    %229 = math.exp %228 : vector<2x128xf32>
    %cst_107 = arith.constant 1.000000e+00 : f32
    %230 = vector.broadcast %cst_107 : f32 to vector<2x128xf32>
    %231 = arith.addf %230, %229 : vector<2x128xf32>
    %232 = arith.divf %230, %231 : vector<2x128xf32>
    %233 = math.tanh %227 : vector<2x128xf32>
    %234 = vector.extract_strided_slice %232 {offsets = [0, 0], sizes = [2, 32], strides = [1, 1]} : vector<2x128xf32> to vector<2x32xf32>
    %235 = vector.extract_strided_slice %232 {offsets = [0, 32], sizes = [2, 32], strides = [1, 1]} : vector<2x128xf32> to vector<2x32xf32>
    %236 = vector.extract_strided_slice %233 {offsets = [0, 64], sizes = [2, 32], strides = [1, 1]} : vector<2x128xf32> to vector<2x32xf32>
    %237 = vector.extract_strided_slice %232 {offsets = [0, 96], sizes = [2, 32], strides = [1, 1]} : vector<2x128xf32> to vector<2x32xf32>
    %238 = arith.mulf %235, %221 : vector<2x32xf32>
    %239 = arith.mulf %234, %236 : vector<2x32xf32>
    %240 = arith.addf %238, %239 : vector<2x32xf32>
    %241 = math.tanh %240 : vector<2x32xf32>
    %242 = arith.mulf %237, %241 : vector<2x32xf32>
    %243 = vector.extract_strided_slice %109 {offsets = [0, 0], sizes = [1, 32], strides = [1, 1]} : vector<2x32xf32> to vector<1x32xf32>
    %244 = vector.extract_strided_slice %128 {offsets = [0, 0], sizes = [1, 32], strides = [1, 1]} : vector<2x32xf32> to vector<1x32xf32>
    %245 = vector.extract_strided_slice %147 {offsets = [0, 0], sizes = [1, 32], strides = [1, 1]} : vector<2x32xf32> to vector<1x32xf32>
    %246 = vector.extract_strided_slice %166 {offsets = [0, 0], sizes = [1, 32], strides = [1, 1]} : vector<2x32xf32> to vector<1x32xf32>
    %247 = vector.extract_strided_slice %185 {offsets = [0, 0], sizes = [1, 32], strides = [1, 1]} : vector<2x32xf32> to vector<1x32xf32>
    %248 = vector.extract_strided_slice %204 {offsets = [0, 0], sizes = [1, 32], strides = [1, 1]} : vector<2x32xf32> to vector<1x32xf32>
    %249 = vector.extract_strided_slice %223 {offsets = [0, 0], sizes = [1, 32], strides = [1, 1]} : vector<2x32xf32> to vector<1x32xf32>
    %250 = vector.extract_strided_slice %242 {offsets = [0, 0], sizes = [1, 32], strides = [1, 1]} : vector<2x32xf32> to vector<1x32xf32>
    %251 = vector.extract_strided_slice %109 {offsets = [1, 0], sizes = [1, 32], strides = [1, 1]} : vector<2x32xf32> to vector<1x32xf32>
    %252 = vector.extract_strided_slice %128 {offsets = [1, 0], sizes = [1, 32], strides = [1, 1]} : vector<2x32xf32> to vector<1x32xf32>
    %253 = vector.extract_strided_slice %147 {offsets = [1, 0], sizes = [1, 32], strides = [1, 1]} : vector<2x32xf32> to vector<1x32xf32>
    %254 = vector.extract_strided_slice %166 {offsets = [1, 0], sizes = [1, 32], strides = [1, 1]} : vector<2x32xf32> to vector<1x32xf32>
    %255 = vector.extract_strided_slice %185 {offsets = [1, 0], sizes = [1, 32], strides = [1, 1]} : vector<2x32xf32> to vector<1x32xf32>
    %256 = vector.extract_strided_slice %204 {offsets = [1, 0], sizes = [1, 32], strides = [1, 1]} : vector<2x32xf32> to vector<1x32xf32>
    %257 = vector.extract_strided_slice %223 {offsets = [1, 0], sizes = [1, 32], strides = [1, 1]} : vector<2x32xf32> to vector<1x32xf32>
    %258 = vector.extract_strided_slice %242 {offsets = [1, 0], sizes = [1, 32], strides = [1, 1]} : vector<2x32xf32> to vector<1x32xf32>
    %259 = tpu.concatenate %243, %244, %245, %246, %247, %248, %249, %250, %251, %252, %253, %254, %255, %256, %257, %258 in 0 : vector<1x32xf32>, vector<1x32xf32>, vector<1x32xf32>, vector<1x32xf32>, vector<1x32xf32>, vector<1x32xf32>, vector<1x32xf32>, vector<1x32xf32>, vector<1x32xf32>, vector<1x32xf32>, vector<1x32xf32>, vector<1x32xf32>, vector<1x32xf32>, vector<1x32xf32>, vector<1x32xf32>, vector<1x32xf32> -> vector<16x32xf32>
    %260 = arith.truncf %259 : vector<16x32xf32> to vector<16x32xbf16>
    %c0_108 = arith.constant 0 : index
    %c0_109 = arith.constant 0 : index
    %261 = vector.load %arg6[%c0_108, %c0_109] : memref<32x8xbf16, #tpu.memory_space<vmem>>, vector<32x8xbf16>
    %cst_110 = arith.constant dense<0.000000e+00> : vector<16x8xf32>
    %262 = tpu.matmul %260, %261, %cst_110 {dimension_numbers = #tpu.dot_dimension_numbers<[1], [0], [0], [1], [0, 0, 1, 1], [], []>} : vector<16x32xbf16>, vector<32x8xbf16>, vector<16x8xf32> -> vector<16x8xf32>
    %c0_111 = arith.constant 0 : index
    %c0_112 = arith.constant 0 : index
    %263 = vector.load %arg7[%c0_111, %c0_112] : memref<1x8xf32, #tpu.memory_space<vmem>>, vector<1x8xf32>
    %264 = vector.broadcast %263 : vector<1x8xf32> to vector<16x8xf32>
    %265 = arith.addf %262, %264 : vector<16x8xf32>
    %c0_113 = arith.constant 0 : index
    %c0_114 = arith.constant 0 : index
    %266 = vector.load %arg8[%c0_113, %c0_114] : memref<16x8xf32, #tpu.memory_space<vmem>>, vector<16x8xf32>
    tpu.vector_store %arg8[%c0_113, %c0_114], %265 {strides = array<i32>} : memref<16x8xf32, #tpu.memory_space<vmem>>, vector<16x8xf32>,
    return
  }
  func.func @transform_0(%arg0: i32, %arg1: memref<16xi32, #tpu.memory_space<smem>>) -> (i32, i32, i32) {
    %c0_i32 = arith.constant 0 : i32
    %c0_i32_0 = arith.constant 0 : i32
    %c0_i32_1 = arith.constant 0 : i32
    %c0_i32_2 = arith.constant 0 : i32
    return %c0_i32, %c0_i32_0, %c0_i32_1 : i32, i32, i32
  }
  func.func @transform_1(%arg0: i32, %arg1: memref<16xi32, #tpu.memory_space<smem>>) -> (i32, i32) {
    %c0_i32 = arith.constant 0 : i32
    %c0_i32_0 = arith.constant 0 : i32
    %c0_i32_1 = arith.constant 0 : i32
    return %c0_i32, %c0_i32_0 : i32, i32
  }
  func.func @transform_2(%arg0: i32, %arg1: memref<16xi32, #tpu.memory_space<smem>>) -> (i32, i32) {
    %c0_i32 = arith.constant 0 : i32
    %c0_i32_0 = arith.constant 0 : i32
    %c0_i32_1 = arith.constant 0 : i32
    return %c0_i32, %c0_i32_0 : i32, i32
  }
  func.func @transform_3(%arg0: i32, %arg1: memref<16xi32, #tpu.memory_space<smem>>) -> (i32, i32) {
    %c0_i32 = arith.constant 0 : i32
    %c0_i32_0 = arith.constant 0 : i32
    %c0_i32_1 = arith.constant 0 : i32
    return %c0_i32, %c0_i32_0 : i32, i32
  }
  func.func @transform_4(%arg0: i32, %arg1: memref<16xi32, #tpu.memory_space<smem>>) -> (i32, i32) {
    %c0_i32 = arith.constant 0 : i32
    %c0_i32_0 = arith.constant 0 : i32
    %c0_i32_1 = arith.constant 0 : i32
    return %c0_i32, %c0_i32_0 : i32, i32
  }
  func.func @transform_5(%arg0: i32, %arg1: memref<16xi32, #tpu.memory_space<smem>>) -> (i32, i32) {
    %c0_i32 = arith.constant 0 : i32
    %c0_i32_0 = arith.constant 0 : i32
    %c0_i32_1 = arith.constant 0 : i32
    return %c0_i32, %c0_i32_0 : i32, i32
  }
  func.func @transform_6(%arg0: i32, %arg1: memref<16xi32, #tpu.memory_space<smem>>) -> (i32, i32) {
    %c0_i32 = arith.constant 0 : i32
    %c0_i32_0 = arith.constant 0 : i32
    %c0_i32_1 = arith.constant 0 : i32
    return %c0_i32, %c0_i32_0 : i32, i32
  }
}

</mosaic_0001>

<llo_original>
// kernel: rnn_seq_label_forward.1
$region0: #{rnn_seq_label_forward.1}
  #allocation0 [shape = 'u32[]', space=smem, size = 0x4, offset = 0x4, fixed_abs, tag = 'smem constant byte address 0x4 - core index']
  #allocation1 [shape = 'u32[144,128]{1,0:T(1,128)}', space=vmem, size = 0x12000, scoped, tag = 'internal scratch']
  #allocation2 [shape = 'f32[16,32]{1,0:T(8,128)}', space=vmem, size = 0x2000, scoped, tag = 'scratch operand']
  #allocation3 [shape = 'f32[16,128]{1,0:T(8,128)}', space=vmem, size = 0x2000, scoped, tag = 'scratch operand']
  #allocation4 [shape = 's32[1]{0}', space=sflag, size = 0x4, scoped, tag = 'scoped memory for rnn_seq_label_forward.1']
  #allocation5 [shape = 'u8[512]{0}', space=smem, size = 0x200, scoped, tag = 'prefetched SMEM operand 0']
  %s0 = inlined_call_operand.vmem [shape: s32[16], index: 0, kind: input, shape index: {}]
  %s1 = inlined_call_operand.vmem [shape: f32[64,1,32], index: 1, kind: input, shape index: {}]
  %s2 = inlined_call_operand.vmem [shape: bf16[32,128], index: 2, kind: input, shape index: {}]
  %s3 = inlined_call_operand.vmem [shape: bf16[32,128], index: 3, kind: input, shape index: {}]
  %s4 = inlined_call_operand.vmem [shape: f32[1,128], index: 4, kind: input, shape index: {}]
  %s5 = inlined_call_operand.vmem [shape: bf16[32,8], index: 5, kind: input, shape index: {}]
  %s6 = inlined_call_operand.vmem [shape: f32[1,8], index: 6, kind: input, shape index: {}]
  %s7 = inlined_call_operand.hbm [shape: f32[16,8], index: 7, kind: output, shape index: {}]
  %s8 = sld [smem:[#allocation0]]
  $region34: #{rnn_seq_label_forward.1} parent=0
    _
  %s10 = ssub.s32 1, %s8
  %s11 = scalar_select 0, %s10, %s8
  %s12 = sshll.u32 %s0, 4
  %s13 = int_to_ptr.vmem [resolvable:$true] %s12
  %15 = dma.vmem_to_smem %s13, 16, [#allocation5], [#allocation4]
  %16 = dma.done [#allocation4], 16
  %17 = sfence
  $region1: #{rnn_seq_label_forward.1} parent=0
    #allocation6 [shape = 'u8[8192]{0}', space=vmem, size = 0x2000, scoped, tag = 'output window, operand 0, single buffered']
    #allocation7 [shape = 's32[1]{0}', space=sflag, size = 0x4, scoped, tag = 'scoped memory for rnn_seq_label_forward.1']
    %18 = vsyncpa [#allocation7], 0
    // Predicated region
    $region2: #{rnn_seq_label_forward.1} parent=1 // pred_check
      _
    $region3: #{rnn_seq_label_forward.1} parent=1 // pred_check_branch
      %20 = sbr.rel (0) target = $region5
    $region4: #{rnn_seq_label_forward.1} parent=1 // pred_region
      _
    $region5: #{rnn_seq_label_forward.1} parent=1 // pred_fallthru
      _
    // Predicated region
    $region6: #{rnn_seq_label_forward.1} parent=1 // pred_check
      _
    $region7: #{rnn_seq_label_forward.1} parent=1 // pred_check_branch
      %22 = sbr.rel (0) target = $region9
    $region8: #{rnn_seq_label_forward.1} parent=1 // pred_region
      _
    $region9: #{rnn_seq_label_forward.1} parent=1 // pred_fallthru
      _
    // Predicated region
    $region10: #{rnn_seq_label_forward.1} parent=1 // pred_check
      _
    $region11: #{rnn_seq_label_forward.1} parent=1 // pred_check_branch
      %24 = sbr.rel (0) target = $region13
    $region12: #{rnn_seq_label_forward.1} parent=1 // pred_region
      _
    $region13: #{rnn_seq_label_forward.1} parent=1 // pred_fallthru
      _
    // Predicated region
    $region14: #{rnn_seq_label_forward.1} parent=1 // pred_check
      _
    $region15: #{rnn_seq_label_forward.1} parent=1 // pred_check_branch
      %26 = sbr.rel (0) target = $region17
    $region16: #{rnn_seq_label_forward.1} parent=1 // pred_region
      _
    $region17: #{rnn_seq_label_forward.1} parent=1 // pred_fallthru
      _
    // Predicated region
    $region18: #{rnn_seq_label_forward.1} parent=1 // pred_check
      _
    $region19: #{rnn_seq_label_forward.1} parent=1 // pred_check_branch
      %28 = sbr.rel (0) target = $region21
    $region20: #{rnn_seq_label_forward.1} parent=1 // pred_region
      _
    $region21: #{rnn_seq_label_forward.1} parent=1 // pred_fallthru
      _
    // Predicated region
    $region22: #{rnn_seq_label_forward.1} parent=1 // pred_check
      _
    $region23: #{rnn_seq_label_forward.1} parent=1 // pred_check_branch
      %30 = sbr.rel (0) target = $region25
    $region24: #{rnn_seq_label_forward.1} parent=1 // pred_region
      _
    $region25: #{rnn_seq_label_forward.1} parent=1 // pred_fallthru
      _
    %s32 = sld [smem:[#allocation5]]
    %s33 = scalar_lea.vmem %s1, %s32
    %v34 = vld [vmem:[%s33] sm:$0x1]
    %vm35 = vcmask 253952
    %36 = vst.msk [vmem:[#allocation2] sm:$0x1] %vm35, %v34
    %s37 = sld [smem:[#allocation5 + $0x8]]
    %s38 = scalar_lea.vmem %s1, %s37
    %v39 = vld [vmem:[%s38] sm:$0x1]
    %40 = vst.msk [vmem:[#allocation2 + $0x1] sm:$0x1] %vm35, %v39
    %s41 = sld [smem:[#allocation5 + $0x1]]
    %s42 = scalar_lea.vmem %s1, %s41
    %v43 = vld [vmem:[%s42] sm:$0x1]
    %44 = vst.msk [vmem:[#allocation2 + $0x2] sm:$0x1] %vm35, %v43
    %s45 = sld [smem:[#allocation5 + $0x9]]
    %s46 = scalar_lea.vmem %s1, %s45
    %v47 = vld [vmem:[%s46] sm:$0x1]
    %48 = vst.msk [vmem:[#allocation2 + $0x3] sm:$0x1] %vm35, %v47
    %s49 = sld [smem:[#allocation5 + $0x2]]
    %s50 = scalar_lea.vmem %s1, %s49
    %v51 = vld [vmem:[%s50] sm:$0x1]
    %52 = vst.msk [vmem:[#allocation2 + $0x4] sm:$0x1] %vm35, %v51
    %s53 = sld [smem:[#allocation5 + $0xa]]
    %s54 = scalar_lea.vmem %s1, %s53
    %v55 = vld [vmem:[%s54] sm:$0x1]
    %56 = vst.msk [vmem:[#allocation2 + $0x5] sm:$0x1] %vm35, %v55
    %s57 = sld [smem:[#allocation5 + $0x3]]
    %s58 = scalar_lea.vmem %s1, %s57
    %v59 = vld [vmem:[%s58] sm:$0x1]
    %60 = vst.msk [vmem:[#allocation2 + $0x6] sm:$0x1] %vm35, %v59
    %s61 = sld [smem:[#allocation5 + $0xb]]
    %s62 = scalar_lea.vmem %s1, %s61
    %v63 = vld [vmem:[%s62] sm:$0x1]
    %64 = vst.msk [vmem:[#allocation2 + $0x7] sm:$0x1] %vm35, %v63
    %s65 = sld [smem:[#allocation5 + $0x4]]
    %s66 = scalar_lea.vmem %s1, %s65
    %v67 = vld [vmem:[%s66] sm:$0x1]
    %68 = vst.msk [vmem:[#allocation2 + $0x8] sm:$0x1] %vm35, %v67
    %s69 = sld [smem:[#allocation5 + $0xc]]
    %s70 = scalar_lea.vmem %s1, %s69
    %v71 = vld [vmem:[%s70] sm:$0x1]
    %72 = vst.msk [vmem:[#allocation2 + $0x9] sm:$0x1] %vm35, %v71
    %s73 = sld [smem:[#allocation5 + $0x5]]
    %s74 = scalar_lea.vmem %s1, %s73
    %v75 = vld [vmem:[%s74] sm:$0x1]
    %76 = vst.msk [vmem:[#allocation2 + $0xa] sm:$0x1] %vm35, %v75
    %s77 = sld [smem:[#allocation5 + $0xd]]
    %s78 = scalar_lea.vmem %s1, %s77
    %v79 = vld [vmem:[%s78] sm:$0x1]
    %80 = vst.msk [vmem:[#allocation2 + $0xb] sm:$0x1] %vm35, %v79
    %s81 = sld [smem:[#allocation5 + $0x6]]
    %s82 = scalar_lea.vmem %s1, %s81
    %v83 = vld [vmem:[%s82] sm:$0x1]
    %84 = vst.msk [vmem:[#allocation2 + $0xc] sm:$0x1] %vm35, %v83
    %s85 = sld [smem:[#allocation5 + $0xe]]
    %s86 = scalar_lea.vmem %s1, %s85
    %v87 = vld [vmem:[%s86] sm:$0x1]
    %88 = vst.msk [vmem:[#allocation2 + $0xd] sm:$0x1] %vm35, %v87
    %s89 = sld [smem:[#allocation5 + $0x7]]
    %s90 = scalar_lea.vmem %s1, %s89
    %v91 = vld [vmem:[%s90] sm:$0x1]
    %92 = vst.msk [vmem:[#allocation2 + $0xe] sm:$0x1] %vm35, %v91
    %s93 = sld [smem:[#allocation5 + $0xf]]
    %s94 = scalar_lea.vmem %s1, %s93
    %v95 = vld [vmem:[%s94] sm:$0x1]
    %96 = vst.msk [vmem:[#allocation2 + $0xf] sm:$0x1] %vm35, %v95
    %v97 = vld [vmem:[#allocation2] sm:$0xff]
    %v98 = vld [vmem:[#allocation2 + $0x8] sm:$0xff]
    %v99 = vpack.c.bf16 %v98, %v97
    %v100 = vld [vmem:[%s2] sm:$0xf]
    %v101 = vld [vmem:[%s2 + $0x4] sm:$0xf]
    %v102 = vld [vmem:[%s2 + $0x8] sm:$0xf]
    %v103 = vld [vmem:[%s2 + $0xc] sm:$0xf]
    %v104 = vld [vmem:[%s4] sm:$0x1]
    %v106 = vlaneseq
    %v107 = vshrl.u32 %v106, 7
    %v108 = vsub.s32 0, %v107
    %v109 = vrot.slane %v104, %v108
    %v115 = vunpack.c.l.b16 %v100
    %v116 = vunpack.c.l.b16 %v101
    %v117 = vunpack.c.l.b16 %v102
    %v118 = vunpack.c.l.b16 %v103
    %v119 = vpack.c.b16 %v116, %v115
    %v120 = vpack.c.b16 %v118, %v117
    %vm123 = vcmask 261120
    %v125 = vsel %vm123, %v99, 0
    %127 = vmatprep.subr.bf16.mxu0 0
    %128 = vmatpush1.bf16.msra.mxu0 %v119
    %129 = vmatprep.subr.bf16.mxu0 0
    %130 = vmatpush1.bf16.msra.mxu0 %v120
    %131 = vmatprep.subr.bf16.mxu0 0
    %132 = vmatpush1.bf16.msra.mxu0 0
    %133 = vmatprep.subr.bf16.mxu0 0
    %134 = vmatpush1.bf16.msra.mxu0 0
    %135 = vmatprep.subr.bf16.mxu0 0
    %136 = vmatpush1.bf16.msra.mxu0 0
    %137 = vmatprep.subr.bf16.mxu0 0
    %138 = vmatpush1.bf16.msra.mxu0 0
    %139 = vmatprep.subr.bf16.mxu0 0
    %140 = vmatpush1.bf16.msra.mxu0 0
    %141 = vmatprep.subr.bf16.mxu0 0
    %142 = vmatpush1.bf16.msra.mxu0 0
    %143 = vmatprep.subr.bf16.mxu0 0
    %144 = vmatpush1.bf16.msra.mxu0 0
    %145 = vmatprep.subr.bf16.mxu0 0
    %146 = vmatpush1.bf16.msra.mxu0 0
    %147 = vmatprep.subr.bf16.mxu0 0
    %148 = vmatpush1.bf16.msra.mxu0 0
    %149 = vmatprep.subr.bf16.mxu0 0
    %150 = vmatpush1.bf16.msra.mxu0 0
    %151 = vmatprep.subr.bf16.mxu0 0
    %152 = vmatpush1.bf16.msra.mxu0 0
    %153 = vmatprep.subr.bf16.mxu0 0
    %154 = vmatpush1.bf16.msra.mxu0 0
    %155 = vmatprep.subr.bf16.mxu0 0
    %156 = vmatpush1.bf16.msra.mxu0 0
    %157 = vmatprep.subr.bf16.mxu0 0
    %158 = vmatpush1.bf16.msra.mxu0 0
    %159 = vmatprep.mubr.bf16.mxu0 0
    %160 = vmatmul.mubr.bf16.gmra.mrb[0].mxu0 %v125
    %v161 = vpop.f32.mrb[0].mxu0
    %v162 = vadd.f32 %v109, %v161
    %v163 = vpop.f32.mrb[0].mxu0
    %v164 = vpop.f32.mrb[0].mxu0
    %v165 = vadd.f32 %v109, %v164
    %v166 = vpop.f32.mrb[0].mxu0
    %167 = vdwg.mxu0
    %168 = vst [vmem:[#allocation3] sm:$0xff] %v162
    %169 = vst [vmem:[#allocation3 + $0x8] sm:$0xff] %v165
    %v170 = vld [vmem:[%s3] sm:$0xf]
    %v171 = vld [vmem:[%s3 + $0x4] sm:$0xf]
    %v172 = vld [vmem:[%s3 + $0x8] sm:$0xf]
    %v173 = vld [vmem:[%s3 + $0xc] sm:$0xf]
    %v174 = vld [vmem:[#allocation3] sm:$0x3]
    %v179 = vunpack.c.l.b16 %v170
    %v180 = vunpack.c.l.b16 %v171
    %v181 = vunpack.c.l.b16 %v172
    %v182 = vunpack.c.l.b16 %v173
    %v183 = vpack.c.b16 %v180, %v179
    %v184 = vpack.c.b16 %v182, %v181
    %v188 = vsel %vm123, 0, 0
    %190 = vmatprep.subr.bf16.mxu0 0
    %191 = vmatpush1.bf16.msra.mxu0 %v183
    %192 = vmatprep.subr.bf16.mxu0 0
    %193 = vmatpush1.bf16.msra.mxu0 %v184
    %194 = vmatprep.subr.bf16.mxu0 0
    %195 = vmatpush1.bf16.msra.mxu0 0
    %196 = vmatprep.subr.bf16.mxu0 0
    %197 = vmatpush1.bf16.msra.mxu0 0
    %198 = vmatprep.subr.bf16.mxu0 0
    %199 = vmatpush1.bf16.msra.mxu0 0
    %200 = vmatprep.subr.bf16.mxu0 0
    %201 = vmatpush1.bf16.msra.mxu0 0
    %202 = vmatprep.subr.bf16.mxu0 0
    %203 = vmatpush1.bf16.msra.mxu0 0
    %204 = vmatprep.subr.bf16.mxu0 0
    %205 = vmatpush1.bf16.msra.mxu0 0
    %206 = vmatprep.subr.bf16.mxu0 0
    %207 = vmatpush1.bf16.msra.mxu0 0
    %208 = vmatprep.subr.bf16.mxu0 0
    %209 = vmatpush1.bf16.msra.mxu0 0
    %210 = vmatprep.subr.bf16.mxu0 0
    %211 = vmatpush1.bf16.msra.mxu0 0
    %212 = vmatprep.subr.bf16.mxu0 0
    %213 = vmatpush1.bf16.msra.mxu0 0
    %214 = vmatprep.subr.bf16.mxu0 0
    %215 = vmatpush1.bf16.msra.mxu0 0
    %216 = vmatprep.subr.bf16.mxu0 0
    %217 = vmatpush1.bf16.msra.mxu0 0
    %218 = vmatprep.subr.bf16.mxu0 0
    %219 = vmatpush1.bf16.msra.mxu0 0
    %220 = vmatprep.subr.bf16.mxu0 0
    %221 = vmatpush1.bf16.msra.mxu0 0
    %222 = vmatprep.mubr.bf16.mxu0 0
    %223 = vmatmul.mubr.bf16.gmra.mrb[0].mxu0 %v188
    %v224 = vpop.f32.mrb[0].mxu0
    %v225 = vadd.f32 0.0, %v224
    %v226 = vpop.f32.mrb[0].mxu0
    %v227 = vpop.f32.mrb[0].mxu0
    %v228 = vpop.f32.mrb[0].mxu0
    %229 = vdwg.mxu0
    %v230 = vadd.f32 %v174, %v225
    %v231 = vxor.u32 %v230, 2147483648
    %v232 = vmul.f32 %v231, 1.442695
    %v233 = vpow.pop %v232
    %v234 = vadd.f32 %v233, 1.0
    %v235 = vrcp.pop %v234
    %v236 = vmul.f32 1.0, %v235
    %v237 = vtanh.pop %v230
    %v238 = vmul.f32 %v236, 0.0
    %240 = vrot.lane.b32.xlu0 %v237, 64
    %v241 = vpop.permute.xlu0 %240
    %v243 = vmul.f32 %v236, %v241
    %245 = vrot.lane.b32.xlu0 %v243, 32
    %v246 = vpop.permute.xlu0 %245
    %v248 = vadd.f32 %v238, %v246
    %v249 = vtanh.pop %v248
    %251 = vrot.lane.b32.xlu0 %v249, 64
    %v252 = vpop.permute.xlu0 %251
    %v254 = vmul.f32 %v236, %v252
    %v255 = vld [vmem:[#allocation3 + $0x2] sm:$0x3]
    %v256 = vpack.c.bf16 %v254, %v254
    %258 = vrot.lane.b32.xlu0 %v256, 32
    %v259 = vpop.permute.xlu0 %258
    %v261 = vsel %vm123, %v259, 0
    %263 = vmatprep.subr.bf16.mxu0 0
    %264 = vmatpush1.bf16.msra.mxu0 %v183
    %265 = vmatprep.subr.bf16.mxu0 0
    %266 = vmatpush1.bf16.msra.mxu0 %v184
    %267 = vmatprep.subr.bf16.mxu0 0
    %268 = vmatpush1.bf16.msra.mxu0 0
    %269 = vmatprep.subr.bf16.mxu0 0
    %270 = vmatpush1.bf16.msra.mxu0 0
    %271 = vmatprep.subr.bf16.mxu0 0
    %272 = vmatpush1.bf16.msra.mxu0 0
    %273 = vmatprep.subr.bf16.mxu0 0
    %274 = vmatpush1.bf16.msra.mxu0 0
    %275 = vmatprep.subr.bf16.mxu0 0
    %276 = vmatpush1.bf16.msra.mxu0 0
    %277 = vmatprep.subr.bf16.mxu0 0
    %278 = vmatpush1.bf16.msra.mxu0 0
    %279 = vmatprep.subr.bf16.mxu0 0
    %280 = vmatpush1.bf16.msra.mxu0 0
    %281 = vmatprep.subr.bf16.mxu0 0
    %282 = vmatpush1.bf16.msra.mxu0 0
    %283 = vmatprep.subr.bf16.mxu0 0
    %284 = vmatpush1.bf16.msra.mxu0 0
    %285 = vmatprep.subr.bf16.mxu0 0
    %286 = vmatpush1.bf16.msra.mxu0 0
    %287 = vmatprep.subr.bf16.mxu0 0
    %288 = vmatpush1.bf16.msra.mxu0 0
    %289 = vmatprep.subr.bf16.mxu0 0
    %290 = vmatpush1.bf16.msra.mxu0 0
    %291 = vmatprep.subr.bf16.mxu0 0
    %292 = vmatpush1.bf16.msra.mxu0 0
    %293 = vmatprep.subr.bf16.mxu0 0
    %294 = vmatpush1.bf16.msra.mxu0 0
    %295 = vmatprep.mubr.bf16.mxu0 0
    %296 = vmatmul.mubr.bf16.gmra.mrb[0].mxu0 %v261
    %v297 = vpop.f32.mrb[0].mxu0
    %v298 = vadd.f32 0.0, %v297
    %v299 = vpop.f32.mrb[0].mxu0
    %v300 = vpop.f32.mrb[0].mxu0
    %v301 = vpop.f32.mrb[0].mxu0
    %302 = vdwg.mxu0
    %v303 = vadd.f32 %v255, %v298
    %v304 = vxor.u32 %v303, 2147483648
    %v305 = vmul.f32 %v304, 1.442695
    %v306 = vpow.pop %v305
    %v307 = vadd.f32 %v306, 1.0
    %v308 = vrcp.pop %v307
    %v309 = vmul.f32 1.0, %v308
    %v310 = vtanh.pop %v303
    %v311 = vmul.f32 %v309, %v248
    %313 = vrot.lane.b32.xlu0 %v310, 64
    %v314 = vpop.permute.xlu0 %313
    %v316 = vmul.f32 %v309, %v314
    %318 = vrot.lane.b32.xlu0 %v316, 32
    %v319 = vpop.permute.xlu0 %318
    %v321 = vadd.f32 %v311, %v319
    %v322 = vtanh.pop %v321
    %324 = vrot.lane.b32.xlu0 %v322, 64
    %v325 = vpop.permute.xlu0 %324
    %v327 = vmul.f32 %v309, %v325
    %v328 = vld [vmem:[#allocation3 + $0x4] sm:$0x3]
    %v329 = vpack.c.bf16 %v327, %v327
    %331 = vrot.lane.b32.xlu0 %v329, 32
    %v332 = vpop.permute.xlu0 %331
    %v334 = vsel %vm123, %v332, 0
    %336 = vmatprep.subr.bf16.mxu0 0
    %337 = vmatpush1.bf16.msra.mxu0 %v183
    %338 = vmatprep.subr.bf16.mxu0 0
    %339 = vmatpush1.bf16.msra.mxu0 %v184
    %340 = vmatprep.subr.bf16.mxu0 0
    %341 = vmatpush1.bf16.msra.mxu0 0
    %342 = vmatprep.subr.bf16.mxu0 0
    %343 = vmatpush1.bf16.msra.mxu0 0
    %344 = vmatprep.subr.bf16.mxu0 0
    %345 = vmatpush1.bf16.msra.mxu0 0
    %346 = vmatprep.subr.bf16.mxu0 0
    %347 = vmatpush1.bf16.msra.mxu0 0
    %348 = vmatprep.subr.bf16.mxu0 0
    %349 = vmatpush1.bf16.msra.mxu0 0
    %350 = vmatprep.subr.bf16.mxu0 0
    %351 = vmatpush1.bf16.msra.mxu0 0
    %352 = vmatprep.subr.bf16.mxu0 0
    %353 = vmatpush1.bf16.msra.mxu0 0
    %354 = vmatprep.subr.bf16.mxu0 0
    %355 = vmatpush1.bf16.msra.mxu0 0
    %356 = vmatprep.subr.bf16.mxu0 0
    %357 = vmatpush1.bf16.msra.mxu0 0
    %358 = vmatprep.subr.bf16.mxu0 0
    %359 = vmatpush1.bf16.msra.mxu0 0
    %360 = vmatprep.subr.bf16.mxu0 0
    %361 = vmatpush1.bf16.msra.mxu0 0
    %362 = vmatprep.subr.bf16.mxu0 0
    %363 = vmatpush1.bf16.msra.mxu0 0
    %364 = vmatprep.subr.bf16.mxu0 0
    %365 = vmatpush1.bf16.msra.mxu0 0
    %366 = vmatprep.subr.bf16.mxu0 0
    %367 = vmatpush1.bf16.msra.mxu0 0
    %368 = vmatprep.mubr.bf16.mxu0 0
    %369 = vmatmul.mubr.bf16.gmra.mrb[0].mxu0 %v334
    %v370 = vpop.f32.mrb[0].mxu0
    %v371 = vadd.f32 0.0, %v370
    %v372 = vpop.f32.mrb[0].mxu0
    %v373 = vpop.f32.mrb[0].mxu0
    %v374 = vpop.f32.mrb[0].mxu0
    %375 = vdwg.mxu0
    %v376 = vadd.f32 %v328, %v371
    %v377 = vxor.u32 %v376, 2147483648
    %v378 = vmul.f32 %v377, 1.442695
    %v379 = vpow.pop %v378
    %v380 = vadd.f32 %v379, 1.0
    %v381 = vrcp.pop %v380
    %v382 = vmul.f32 1.0, %v381
    %v383 = vtanh.pop %v376
    %v384 = vmul.f32 %v382, %v321
    %386 = vrot.lane.b32.xlu0 %v383, 64
    %v387 = vpop.permute.xlu0 %386
    %v389 = vmul.f32 %v382, %v387
    %391 = vrot.lane.b32.xlu0 %v389, 32
    %v392 = vpop.permute.xlu0 %391
    %v394 = vadd.f32 %v384, %v392
    %v395 = vtanh.pop %v394
    %397 = vrot.lane.b32.xlu0 %v395, 64
    %v398 = vpop.permute.xlu0 %397
    %v400 = vmul.f32 %v382, %v398
    %v401 = vld [vmem:[#allocation3 + $0x6] sm:$0x3]
    %v402 = vpack.c.bf16 %v400, %v400
    %404 = vrot.lane.b32.xlu0 %v402, 32
    %v405 = vpop.permute.xlu0 %404
    %v407 = vsel %vm123, %v405, 0
    %409 = vmatprep.subr.bf16.mxu0 0
    %410 = vmatpush1.bf16.msra.mxu0 %v183
    %411 = vmatprep.subr.bf16.mxu0 0
    %412 = vmatpush1.bf16.msra.mxu0 %v184
    %413 = vmatprep.subr.bf16.mxu0 0
    %414 = vmatpush1.bf16.msra.mxu0 0
    %415 = vmatprep.subr.bf16.mxu0 0
    %416 = vmatpush1.bf16.msra.mxu0 0
    %417 = vmatprep.subr.bf16.mxu0 0
    %418 = vmatpush1.bf16.msra.mxu0 0
    %419 = vmatprep.subr.bf16.mxu0 0
    %420 = vmatpush1.bf16.msra.mxu0 0
    %421 = vmatprep.subr.bf16.mxu0 0
    %422 = vmatpush1.bf16.msra.mxu0 0
    %423 = vmatprep.subr.bf16.mxu0 0
    %424 = vmatpush1.bf16.msra.mxu0 0
    %425 = vmatprep.subr.bf16.mxu0 0
    %426 = vmatpush1.bf16.msra.mxu0 0
    %427 = vmatprep.subr.bf16.mxu0 0
    %428 = vmatpush1.bf16.msra.mxu0 0
    %429 = vmatprep.subr.bf16.mxu0 0
    %430 = vmatpush1.bf16.msra.mxu0 0
    %431 = vmatprep.subr.bf16.mxu0 0
    %432 = vmatpush1.bf16.msra.mxu0 0
    %433 = vmatprep.subr.bf16.mxu0 0
    %434 = vmatpush1.bf16.msra.mxu0 0
    %435 = vmatprep.subr.bf16.mxu0 0
    %436 = vmatpush1.bf16.msra.mxu0 0
    %437 = vmatprep.subr.bf16.mxu0 0
    %438 = vmatpush1.bf16.msra.mxu0 0
    %439 = vmatprep.subr.bf16.mxu0 0
    %440 = vmatpush1.bf16.msra.mxu0 0
    %441 = vmatprep.mubr.bf16.mxu0 0
    %442 = vmatmul.mubr.bf16.gmra.mrb[0].mxu0 %v407
    %v443 = vpop.f32.mrb[0].mxu0
    %v444 = vadd.f32 0.0, %v443
    %v445 = vpop.f32.mrb[0].mxu0
    %v446 = vpop.f32.mrb[0].mxu0
    %v447 = vpop.f32.mrb[0].mxu0
    %448 = vdwg.mxu0
    %v449 = vadd.f32 %v401, %v444
    %v450 = vxor.u32 %v449, 2147483648
    %v451 = vmul.f32 %v450, 1.442695
    %v452 = vpow.pop %v451
    %v453 = vadd.f32 %v452, 1.0
    %v454 = vrcp.pop %v453
    %v455 = vmul.f32 1.0, %v454
    %v456 = vtanh.pop %v449
    %v457 = vmul.f32 %v455, %v394
    %459 = vrot.lane.b32.xlu0 %v456, 64
    %v460 = vpop.permute.xlu0 %459
    %v462 = vmul.f32 %v455, %v460
    %464 = vrot.lane.b32.xlu0 %v462, 32
    %v465 = vpop.permute.xlu0 %464
    %v467 = vadd.f32 %v457, %v465
    %v468 = vtanh.pop %v467
    %470 = vrot.lane.b32.xlu0 %v468, 64
    %v471 = vpop.permute.xlu0 %470
    %v473 = vmul.f32 %v455, %v471
    %v474 = vld [vmem:[#allocation3 + $0x8] sm:$0x3]
    %v475 = vpack.c.bf16 %v473, %v473
    %477 = vrot.lane.b32.xlu0 %v475, 32
    %v478 = vpop.permute.xlu0 %477
    %v480 = vsel %vm123, %v478, 0
    %482 = vmatprep.subr.bf16.mxu0 0
    %483 = vmatpush1.bf16.msra.mxu0 %v183
    %484 = vmatprep.subr.bf16.mxu0 0
    %485 = vmatpush1.bf16.msra.mxu0 %v184
    %486 = vmatprep.subr.bf16.mxu0 0
    %487 = vmatpush1.bf16.msra.mxu0 0
    %488 = vmatprep.subr.bf16.mxu0 0
    %489 = vmatpush1.bf16.msra.mxu0 0
    %490 = vmatprep.subr.bf16.mxu0 0
    %491 = vmatpush1.bf16.msra.mxu0 0
    %492 = vmatprep.subr.bf16.mxu0 0
    %493 = vmatpush1.bf16.msra.mxu0 0
    %494 = vmatprep.subr.bf16.mxu0 0
    %495 = vmatpush1.bf16.msra.mxu0 0
    %496 = vmatprep.subr.bf16.mxu0 0
    %497 = vmatpush1.bf16.msra.mxu0 0
    %498 = vmatprep.subr.bf16.mxu0 0
    %499 = vmatpush1.bf16.msra.mxu0 0
    %500 = vmatprep.subr.bf16.mxu0 0
    %501 = vmatpush1.bf16.msra.mxu0 0
    %502 = vmatprep.subr.bf16.mxu0 0
    %503 = vmatpush1.bf16.msra.mxu0 0
    %504 = vmatprep.subr.bf16.mxu0 0
    %505 = vmatpush1.bf16.msra.mxu0 0
    %506 = vmatprep.subr.bf16.mxu0 0
    %507 = vmatpush1.bf16.msra.mxu0 0
    %508 = vmatprep.subr.bf16.mxu0 0
    %509 = vmatpush1.bf16.msra.mxu0 0
    %510 = vmatprep.subr.bf16.mxu0 0
    %511 = vmatpush1.bf16.msra.mxu0 0
    %512 = vmatprep.subr.bf16.mxu0 0
    %513 = vmatpush1.bf16.msra.mxu0 0
    %514 = vmatprep.mubr.bf16.mxu0 0
    %515 = vmatmul.mubr.bf16.gmra.mrb[0].mxu0 %v480
    %v516 = vpop.f32.mrb[0].mxu0
    %v517 = vadd.f32 0.0, %v516
    %v518 = vpop.f32.mrb[0].mxu0
    %v519 = vpop.f32.mrb[0].mxu0
    %v520 = vpop.f32.mrb[0].mxu0
    %521 = vdwg.mxu0
    %v522 = vadd.f32 %v474, %v517
    %v523 = vxor.u32 %v522, 2147483648
    %v524 = vmul.f32 %v523, 1.442695
    %v525 = vpow.pop %v524
    %v526 = vadd.f32 %v525, 1.0
    %v527 = vrcp.pop %v526
    %v528 = vmul.f32 1.0, %v527
    %v529 = vtanh.pop %v522
    %v530 = vmul.f32 %v528, %v467
    %532 = vrot.lane.b32.xlu0 %v529, 64
    %v533 = vpop.permute.xlu0 %532
    %v535 = vmul.f32 %v528, %v533
    %537 = vrot.lane.b32.xlu0 %v535, 32
    %v538 = vpop.permute.xlu0 %537
    %v540 = vadd.f32 %v530, %v538
    %v541 = vtanh.pop %v540
    %543 = vrot.lane.b32.xlu0 %v541, 64
    %v544 = vpop.permute.xlu0 %543
    %v546 = vmul.f32 %v528, %v544
    %v547 = vld [vmem:[#allocation3 + $0xa] sm:$0x3]
    %v548 = vpack.c.bf16 %v546, %v546
    %550 = vrot.lane.b32.xlu0 %v548, 32
    %v551 = vpop.permute.xlu0 %550
    %v553 = vsel %vm123, %v551, 0
    %555 = vmatprep.subr.bf16.mxu0 0
    %556 = vmatpush1.bf16.msra.mxu0 %v183
    %557 = vmatprep.subr.bf16.mxu0 0
    %558 = vmatpush1.bf16.msra.mxu0 %v184
    %559 = vmatprep.subr.bf16.mxu0 0
    %560 = vmatpush1.bf16.msra.mxu0 0
    %561 = vmatprep.subr.bf16.mxu0 0
    %562 = vmatpush1.bf16.msra.mxu0 0
    %563 = vmatprep.subr.bf16.mxu0 0
    %564 = vmatpush1.bf16.msra.mxu0 0
    %565 = vmatprep.subr.bf16.mxu0 0
    %566 = vmatpush1.bf16.msra.mxu0 0
    %567 = vmatprep.subr.bf16.mxu0 0
    %568 = vmatpush1.bf16.msra.mxu0 0
    %569 = vmatprep.subr.bf16.mxu0 0
    %570 = vmatpush1.bf16.msra.mxu0 0
    %571 = vmatprep.subr.bf16.mxu0 0
    %572 = vmatpush1.bf16.msra.mxu0 0
    %573 = vmatprep.subr.bf16.mxu0 0
    %574 = vmatpush1.bf16.msra.mxu0 0
    %575 = vmatprep.subr.bf16.mxu0 0
    %576 = vmatpush1.bf16.msra.mxu0 0
    %577 = vmatprep.subr.bf16.mxu0 0
    %578 = vmatpush1.bf16.msra.mxu0 0
    %579 = vmatprep.subr.bf16.mxu0 0
    %580 = vmatpush1.bf16.msra.mxu0 0
    %581 = vmatprep.subr.bf16.mxu0 0
    %582 = vmatpush1.bf16.msra.mxu0 0
    %583 = vmatprep.subr.bf16.mxu0 0
    %584 = vmatpush1.bf16.msra.mxu0 0
    %585 = vmatprep.subr.bf16.mxu0 0
    %586 = vmatpush1.bf16.msra.mxu0 0
    %587 = vmatprep.mubr.bf16.mxu0 0
    %588 = vmatmul.mubr.bf16.gmra.mrb[0].mxu0 %v553
    %v589 = vpop.f32.mrb[0].mxu0
    %v590 = vadd.f32 0.0, %v589
    %v591 = vpop.f32.mrb[0].mxu0
    %v592 = vpop.f32.mrb[0].mxu0
    %v593 = vpop.f32.mrb[0].mxu0
    %594 = vdwg.mxu0
    %v595 = vadd.f32 %v547, %v590
    %v596 = vxor.u32 %v595, 2147483648
    %v597 = vmul.f32 %v596, 1.442695
    %v598 = vpow.pop %v597
    %v599 = vadd.f32 %v598, 1.0
    %v600 = vrcp.pop %v599
    %v601 = vmul.f32 1.0, %v600
    %v602 = vtanh.pop %v595
    %v603 = vmul.f32 %v601, %v540
    %605 = vrot.lane.b32.xlu0 %v602, 64
    %v606 = vpop.permute.xlu0 %605
    %v608 = vmul.f32 %v601, %v606
    %610 = vrot.lane.b32.xlu0 %v608, 32
    %v611 = vpop.permute.xlu0 %610
    %v613 = vadd.f32 %v603, %v611
    %v614 = vtanh.pop %v613
    %616 = vrot.lane.b32.xlu0 %v614, 64
    %v617 = vpop.permute.xlu0 %616
    %v619 = vmul.f32 %v601, %v617
    %v620 = vld [vmem:[#allocation3 + $0xc] sm:$0x3]
    %v621 = vpack.c.bf16 %v619, %v619
    %623 = vrot.lane.b32.xlu0 %v621, 32
    %v624 = vpop.permute.xlu0 %623
    %v626 = vsel %vm123, %v624, 0
    %628 = vmatprep.subr.bf16.mxu0 0
    %629 = vmatpush1.bf16.msra.mxu0 %v183
    %630 = vmatprep.subr.bf16.mxu0 0
    %631 = vmatpush1.bf16.msra.mxu0 %v184
    %632 = vmatprep.subr.bf16.mxu0 0
    %633 = vmatpush1.bf16.msra.mxu0 0
    %634 = vmatprep.subr.bf16.mxu0 0
    %635 = vmatpush1.bf16.msra.mxu0 0
    %636 = vmatprep.subr.bf16.mxu0 0
    %637 = vmatpush1.bf16.msra.mxu0 0
    %638 = vmatprep.subr.bf16.mxu0 0
    %639 = vmatpush1.bf16.msra.mxu0 0
    %640 = vmatprep.subr.bf16.mxu0 0
    %641 = vmatpush1.bf16.msra.mxu0 0
    %642 = vmatprep.subr.bf16.mxu0 0
    %643 = vmatpush1.bf16.msra.mxu0 0
    %644 = vmatprep.subr.bf16.mxu0 0
    %645 = vmatpush1.bf16.msra.mxu0 0
    %646 = vmatprep.subr.bf16.mxu0 0
    %647 = vmatpush1.bf16.msra.mxu0 0
    %648 = vmatprep.subr.bf16.mxu0 0
    %649 = vmatpush1.bf16.msra.mxu0 0
    %650 = vmatprep.subr.bf16.mxu0 0
    %651 = vmatpush1.bf16.msra.mxu0 0
    %652 = vmatprep.subr.bf16.mxu0 0
    %653 = vmatpush1.bf16.msra.mxu0 0
    %654 = vmatprep.subr.bf16.mxu0 0
    %655 = vmatpush1.bf16.msra.mxu0 0
    %656 = vmatprep.subr.bf16.mxu0 0
    %657 = vmatpush1.bf16.msra.mxu0 0
    %658 = vmatprep.subr.bf16.mxu0 0
    %659 = vmatpush1.bf16.msra.mxu0 0
    %660 = vmatprep.mubr.bf16.mxu0 0
    %661 = vmatmul.mubr.bf16.gmra.mrb[0].mxu0 %v626
    %v662 = vpop.f32.mrb[0].mxu0
    %v663 = vadd.f32 0.0, %v662
    %v664 = vpop.f32.mrb[0].mxu0
    %v665 = vpop.f32.mrb[0].mxu0
    %v666 = vpop.f32.mrb[0].mxu0
    %667 = vdwg.mxu0
    %v668 = vadd.f32 %v620, %v663
    %v669 = vxor.u32 %v668, 2147483648
    %v670 = vmul.f32 %v669, 1.442695
    %v671 = vpow.pop %v670
    %v672 = vadd.f32 %v671, 1.0
    %v673 = vrcp.pop %v672
    %v674 = vmul.f32 1.0, %v673
    %v675 = vtanh.pop %v668
    %v676 = vmul.f32 %v674, %v613
    %678 = vrot.lane.b32.xlu0 %v675, 64
    %v679 = vpop.permute.xlu0 %678
    %v681 = vmul.f32 %v674, %v679
    %683 = vrot.lane.b32.xlu0 %v681, 32
    %v684 = vpop.permute.xlu0 %683
    %v686 = vadd.f32 %v676, %v684
    %v687 = vtanh.pop %v686
    %689 = vrot.lane.b32.xlu0 %v687, 64
    %v690 = vpop.permute.xlu0 %689
    %v692 = vmul.f32 %v674, %v690
    %v693 = vld [vmem:[#allocation3 + $0xe] sm:$0x3]
    %v694 = vpack.c.bf16 %v692, %v692
    %696 = vrot.lane.b32.xlu0 %v694, 32
    %v697 = vpop.permute.xlu0 %696
    %v699 = vsel %vm123, %v697, 0
    %701 = vmatprep.subr.bf16.mxu0 0
    %702 = vmatpush1.bf16.msra.mxu0 %v183
    %703 = vmatprep.subr.bf16.mxu0 0
    %704 = vmatpush1.bf16.msra.mxu0 %v184
    %705 = vmatprep.subr.bf16.mxu0 0
    %706 = vmatpush1.bf16.msra.mxu0 0
    %707 = vmatprep.subr.bf16.mxu0 0
    %708 = vmatpush1.bf16.msra.mxu0 0
    %709 = vmatprep.subr.bf16.mxu0 0
    %710 = vmatpush1.bf16.msra.mxu0 0
    %711 = vmatprep.subr.bf16.mxu0 0
    %712 = vmatpush1.bf16.msra.mxu0 0
    %713 = vmatprep.subr.bf16.mxu0 0
    %714 = vmatpush1.bf16.msra.mxu0 0
    %715 = vmatprep.subr.bf16.mxu0 0
    %716 = vmatpush1.bf16.msra.mxu0 0
    %717 = vmatprep.subr.bf16.mxu0 0
    %718 = vmatpush1.bf16.msra.mxu0 0
    %719 = vmatprep.subr.bf16.mxu0 0
    %720 = vmatpush1.bf16.msra.mxu0 0
    %721 = vmatprep.subr.bf16.mxu0 0
    %722 = vmatpush1.bf16.msra.mxu0 0
    %723 = vmatprep.subr.bf16.mxu0 0
    %724 = vmatpush1.bf16.msra.mxu0 0
    %725 = vmatprep.subr.bf16.mxu0 0
    %726 = vmatpush1.bf16.msra.mxu0 0
    %727 = vmatprep.subr.bf16.mxu0 0
    %728 = vmatpush1.bf16.msra.mxu0 0
    %729 = vmatprep.subr.bf16.mxu0 0
    %730 = vmatpush1.bf16.msra.mxu0 0
    %731 = vmatprep.subr.bf16.mxu0 0
    %732 = vmatpush1.bf16.msra.mxu0 0
    %733 = vmatprep.mubr.bf16.mxu0 0
    %734 = vmatmul.mubr.bf16.gmra.mrb[0].mxu0 %v699
    %v735 = vpop.f32.mrb[0].mxu0
    %v736 = vadd.f32 0.0, %v735
    %v737 = vpop.f32.mrb[0].mxu0
    %v738 = vpop.f32.mrb[0].mxu0
    %v739 = vpop.f32.mrb[0].mxu0
    %740 = vdwg.mxu0
    %v741 = vadd.f32 %v693, %v736
    %v742 = vxor.u32 %v741, 2147483648
    %v743 = vmul.f32 %v742, 1.442695
    %v744 = vpow.pop %v743
    %v745 = vadd.f32 %v744, 1.0
    %v746 = vrcp.pop %v745
    %v747 = vmul.f32 1.0, %v746
    %v748 = vtanh.pop %v741
    %v749 = vmul.f32 %v747, %v686
    %751 = vrot.lane.b32.xlu0 %v748, 64
    %v752 = vpop.permute.xlu0 %751
    %v754 = vmul.f32 %v747, %v752
    %756 = vrot.lane.b32.xlu0 %v754, 32
    %v757 = vpop.permute.xlu0 %756
    %v759 = vadd.f32 %v749, %v757
    %v760 = vtanh.pop %v759
    %762 = vrot.lane.b32.xlu0 %v760, 64
    %v763 = vpop.permute.xlu0 %762
    %v765 = vmul.f32 %v747, %v763
    %v767 = vrot.slane %v327, 7
    %v770 = vrot.slane %v400, 6
    %v773 = vrot.slane %v473, 5
    %v776 = vrot.slane %v546, 4
    %v779 = vrot.slane %v619, 3
    %v782 = vrot.slane %v692, 2
    %v785 = vrot.slane %v765, 1
    %v788 = vrot.slane %v254, 1
    %v790 = vrot.slane %v400, 7
    %v792 = vrot.slane %v473, 6
    %v794 = vrot.slane %v546, 5
    %v796 = vrot.slane %v619, 4
    %v798 = vrot.slane %v692, 3
    %v800 = vrot.slane %v765, 2
    %vm802 = vcmask 1040384
    %v803 = vsel %vm802, %v254, %v767
    %vm804 = vcmask 1041408
    %v805 = vsel %vm804, %v803, %v770
    %vm806 = vcmask 1042432
    %v807 = vsel %vm806, %v805, %v773
    %vm808 = vcmask 1043456
    %v809 = vsel %vm808, %v807, %v776
    %vm810 = vcmask 1044480
    %v811 = vsel %vm810, %v809, %v779
    %vm812 = vcmask 1045504
    %v813 = vsel %vm812, %v811, %v782
    %vm814 = vcmask 1046528
    %v815 = vsel %vm814, %v813, %v785
    %v816 = vsel %vm802, %v788, %v327
    %v817 = vsel %vm804, %v816, %v790
    %v818 = vsel %vm806, %v817, %v792
    %v819 = vsel %vm808, %v818, %v794
    %v820 = vsel %vm810, %v819, %v796
    %v821 = vsel %vm812, %v820, %v798
    %v822 = vsel %vm814, %v821, %v800
    %v823 = vpack.c.bf16 %v822, %v815
    %v824 = vld [vmem:[%s5] sm:$0xf]
    %v825 = vld [vmem:[%s5 + $0x4] sm:$0xf]
    %v826 = vld [vmem:[%s5 + $0x8] sm:$0xf]
    %v827 = vld [vmem:[%s5 + $0xc] sm:$0xf]
    %v828 = vld [vmem:[%s6] sm:$0x1]
    %v830 = vlaneseq
    %v831 = vshrl.u32 %v830, 7
    %v832 = vsub.s32 0, %v831
    %v833 = vrot.slane %v828, %v832
    %836 = vrot.lane.b32.xlu0 %v823, 32
    %v837 = vpop.permute.xlu0 %836
    %v842 = vunpack.c.l.b16 %v824
    %v843 = vunpack.c.l.b16 %v825
    %v844 = vunpack.c.l.b16 %v826
    %v845 = vunpack.c.l.b16 %v827
    %v846 = vpack.c.b16 %v843, %v842
    %v847 = vpack.c.b16 %v845, %v844
    %v851 = vsel %vm123, %v837, 0
    %853 = vmatprep.subr.bf16.mxu0 0
    %854 = vmatpush1.bf16.msra.mxu0 %v846
    %855 = vmatprep.subr.bf16.mxu0 0
    %856 = vmatpush1.bf16.msra.mxu0 %v847
    %857 = vmatprep.subr.bf16.mxu0 0
    %858 = vmatpush1.bf16.msra.mxu0 0
    %859 = vmatprep.subr.bf16.mxu0 0
    %860 = vmatpush1.bf16.msra.mxu0 0
    %861 = vmatprep.subr.bf16.mxu0 0
    %862 = vmatpush1.bf16.msra.mxu0 0
    %863 = vmatprep.subr.bf16.mxu0 0
    %864 = vmatpush1.bf16.msra.mxu0 0
    %865 = vmatprep.subr.bf16.mxu0 0
    %866 = vmatpush1.bf16.msra.mxu0 0
    %867 = vmatprep.subr.bf16.mxu0 0
    %868 = vmatpush1.bf16.msra.mxu0 0
    %869 = vmatprep.subr.bf16.mxu0 0
    %870 = vmatpush1.bf16.msra.mxu0 0
    %871 = vmatprep.subr.bf16.mxu0 0
    %872 = vmatpush1.bf16.msra.mxu0 0
    %873 = vmatprep.subr.bf16.mxu0 0
    %874 = vmatpush1.bf16.msra.mxu0 0
    %875 = vmatprep.subr.bf16.mxu0 0
    %876 = vmatpush1.bf16.msra.mxu0 0
    %877 = vmatprep.subr.bf16.mxu0 0
    %878 = vmatpush1.bf16.msra.mxu0 0
    %879 = vmatprep.subr.bf16.mxu0 0
    %880 = vmatpush1.bf16.msra.mxu0 0
    %881 = vmatprep.subr.bf16.mxu0 0
    %882 = vmatpush1.bf16.msra.mxu0 0
    %883 = vmatprep.subr.bf16.mxu0 0
    %884 = vmatpush1.bf16.msra.mxu0 0
    %885 = vmatprep.mubr.bf16.mxu0 0
    %886 = vmatmul.mubr.bf16.gmra.mrb[0].mxu0 %v851
    %v887 = vpop.f32.mrb[0].mxu0
    %v888 = vadd.f32 %v833, %v887
    %v889 = vpop.f32.mrb[0].mxu0
    %v890 = vpop.f32.mrb[0].mxu0
    %v891 = vadd.f32 %v833, %v890
    %v892 = vpop.f32.mrb[0].mxu0
    %893 = vdwg.mxu0
    %vm894 = vcmask 64512
    %895 = vst.msk [vmem:[#allocation6] sm:$0xff] %vm894, %v888
    %896 = vst.msk [vmem:[#allocation6 + $0x8] sm:$0xff] %vm894, %v891
    // Predicated region
    $region26: #{rnn_seq_label_forward.1} parent=1 // pred_check
      _
    $region27: #{rnn_seq_label_forward.1} parent=1 // pred_check_branch
      %898 = sbr.rel (0) target = $region29
    $region28: #{rnn_seq_label_forward.1} parent=1 // pred_region
      %s900 = ssub.s32 256, 256
      %901 = vsyncadd [#allocation7], %s900
      %s902 = sshll.u32 [#allocation6], 4
      %s903 = int_to_ptr.vmem [resolvable:$true] %s902
      %908 = dma.vmem_to_hbm [thread:$0]  %s903, 256, %s7, [#allocation7], 128, 128, 8
    $region29: #{rnn_seq_label_forward.1} parent=1 // pred_fallthru
      _
    // Predicated region
    $region30: #{rnn_seq_label_forward.1} parent=1 // pred_check
      _
    $region31: #{rnn_seq_label_forward.1} parent=1 // pred_check_branch
      %910 = sbr.rel (0) target = $region33
    $region32: #{rnn_seq_label_forward.1} parent=1 // pred_region
      %911 = dma.done [#allocation7], 256
    $region33: #{rnn_seq_label_forward.1} parent=1 // pred_fallthru
      _
    %912 = vsyncpa [#allocation7], 1

</llo_original>
